<compile_context>
chip_gen: v7x
topology: tpu7x:2x2x1
jax: 0.10.0
libtpu: 0.0.40
codegen_flags: <defaults>
</compile_context>

<pallas_src>
import jax
import jax.numpy as jnp
from jax import lax
from jax.experimental import pallas as pl
from jax.experimental.pallas import tpu as pltpu


# ----------------------------- Pallas kernel -----------------------------

def _make_bnn_kernel(n_models: int, out_dim: int, lane_out: int):
    """Kernel: full ensemble forward + mean / unbiased-variance / log in one shot."""

    def kernel(x_ref,
               w1_ref, b1_ref, w2_ref, b2_ref, w3_ref, b3_ref, w4_ref, b4_ref,
               out_ref):
        x = x_ref[...]                                               # (B, in_dim)

        # Layer 1: shared input, member outputs packed along lanes -> (B, n*hidden).
        h = jnp.maximum(
            jnp.dot(x, w1_ref[...], preferred_element_type=jnp.float32) + b1_ref[...],
            0.0)
        # Layers 2-4: block-diagonal weights keep each member's activations private.
        h = jnp.maximum(
            jnp.dot(h, w2_ref[...], preferred_element_type=jnp.float32) + b2_ref[...],
            0.0)
        h = jnp.maximum(
            jnp.dot(h, w3_ref[...], preferred_element_type=jnp.float32) + b3_ref[...],
            0.0)
        y = jnp.dot(h, w4_ref[...], preferred_element_type=jnp.float32) + b4_ref[...]
        # y: (B, n_models*out_dim), member m's outputs in lanes [m*out : (m+1)*out].

        no = n_models * out_dim
        # S (no, out): sums over member blocks.  R (out, no): replicates (B,out) into
        # every member block.  Both are tiny 0/1 matrices built from iota (no DMA).
        r1 = lax.broadcasted_iota(jnp.int32, (no, out_dim), 0)
        c1 = lax.broadcasted_iota(jnp.int32, (no, out_dim), 1)
        S = (r1 % out_dim == c1).astype(jnp.float32)
        r2 = lax.broadcasted_iota(jnp.int32, (out_dim, no), 0)
        c2 = lax.broadcasted_iota(jnp.int32, (out_dim, no), 1)
        R = (c2 % out_dim == r2).astype(jnp.float32)

        mu = jnp.dot(y, S, preferred_element_type=jnp.float32) * (1.0 / n_models)
        dev = y - jnp.dot(mu, R, preferred_element_type=jnp.float32)   # centered
        var = jnp.dot(dev * dev, S, preferred_element_type=jnp.float32) * (
            1.0 / (n_models - 1))
        logvar = jnp.log(var)

        # Single lane-dense store: [ mu | logvar | zero pad ] -> (B, lane_out).
        bsz = x.shape[0]
        pad = jnp.zeros((bsz, lane_out - 2 * out_dim), jnp.float32)
        out_ref[...] = jnp.concatenate([mu, logvar, pad], axis=1)

    return kernel


def bnn_density_forward(x, packed_params, n_models, out_dim):
    """x: (B, in_dim) f32.  packed_params: tuple of 8 packed weight/bias arrays."""
    B = x.shape[0]
    lane_out = ((2 * out_dim + 127) // 128) * 128           # lane-dense output width

    arrays = (x,) + tuple(packed_params)
    in_specs = [pl.BlockSpec(a.shape, lambda i: (0, 0)) for a in arrays]

    out = pl.pallas_call(
        _make_bnn_kernel(n_models, out_dim, lane_out),
        out_shape=jax.ShapeDtypeStruct((B, lane_out), jnp.float32),
        grid=(1,),                                           # single invocation
        in_specs=in_specs,
        out_specs=pl.BlockSpec((B, lane_out), lambda i: (0, 0)),
        compiler_params=pltpu.CompilerParams(dimension_semantics=("arbitrary",)),
    )(*arrays)

    mu = out[:, :out_dim]
    logvar = out[:, out_dim:2 * out_dim]
    return mu, logvar


# ---------------- parameter setup & packing (plain JAX glue) ----------------

def init_bayesian_linear(key, in_f, out_f):
    """Mirror of BayesianLinear.__init__ / reset_parameters (deterministic)."""
    k1, k2, k3, k4 = jax.random.split(key, 4)
    a = float(jnp.sqrt(6.0 / (in_f + out_f)))                 # xavier_uniform bound
    weight_mu = jax.random.uniform(k1, (out_f, in_f), jnp.float32, -a, a)
    weight_logvar = jax.random.uniform(k2, (out_f, in_f), jnp.float32, -5.0, -4.0)
    bound = float(1.0 / jnp.sqrt(jnp.float32(in_f + out_f)))
    bias_mu = jax.random.uniform(k3, (out_f,), jnp.float32, -bound, bound)
    bias_logvar = jax.random.uniform(k4, (out_f,), jnp.float32, -5.0, -4.0)
    return weight_mu, weight_logvar, bias_mu, bias_logvar


def sample_layer(key, layer_params, n_models):
    """Per-member reparameterized weights, sampled directly in (n, in, out) layout."""
    weight_mu, weight_logvar, bias_mu, bias_logvar = layer_params     # torch (out,in)
    kw, kb = jax.random.split(key)
    out_f, in_f = weight_mu.shape
    mu_t = weight_mu.T                                   # one transpose, not per-member
    std_t = jnp.exp(0.5 * weight_logvar).T
    w_eps = jax.random.normal(kw, (n_models, in_f, out_f), jnp.float32)
    b_eps = jax.random.normal(kb, (n_models, out_f), jnp.float32)
    w = mu_t[None] + std_t[None] * w_eps                 # (n, in, out)
    b = bias_mu[None] + jnp.exp(0.5 * bias_logvar)[None] * b_eps      # (n, out)
    return w.astype(jnp.float32), b.astype(jnp.float32)


def pack_ensemble_params(sampled):
    """Build MXU-friendly packed / block-diagonal weights for the kernel."""
    (w1, b1), (w2, b2), (w3, b3), (w4, b4) = sampled
    n = w1.shape[0]

    def block_diag(w):                                   # (n, h, o) -> (n*h, n*o)
        n_, h, o = w.shape
        eye = jnp.eye(n_, dtype=w.dtype)
        return jnp.einsum('nho,nm->nhmo', w, eye).reshape(n_ * h, n_ * o)

    def pack_bias(b):                                    # (n, o) -> (1, n*o)
        return b.reshape(1, -1)

    # Layer 1 shares the input x, so just pack member output blocks along lanes.
    w1p = jnp.transpose(w1, (1, 0, 2)).reshape(w1.shape[1], n * w1.shape[2])

    return (w1p, pack_bias(b1),
            block_diag(w2), pack_bias(b2),
            block_diag(w3), pack_bias(b3),
            block_diag(w4), pack_bias(b4))


# ----------------------------- reference -----------------------------

def reference_forward(x, sampled, n_models):
    outs = []
    for m in range(n_models):
        h = x
        for li, (w, b) in enumerate(sampled):
            h = h @ w[m] + b[m]
            if li < len(sampled) - 1:
                h = jnp.maximum(h, 0.0)
        outs.append(h)
    outs = jnp.stack(outs)
    mu = jnp.mean(outs, axis=0)
    var = jnp.var(outs, axis=0, ddof=1)
    return mu, jnp.log(var)


if __name__ == "__main__":
    input_dim, hidden_dim, output_dim, n_models = 8, 32, 4, 10
    batch = 16

    root = jax.random.PRNGKey(0)
    k_x, k_p, k_s = jax.random.split(root, 3)

    x = jax.random.normal(k_x, (batch, input_dim), jnp.float32)

    # Build the 4 BayesianLinear layers deterministically.
    layer_dims = [(input_dim, hidden_dim), (hidden_dim, hidden_dim),
                  (hidden_dim, hidden_dim), (hidden_dim, output_dim)]
    pkeys = jax.random.split(k_p, len(layer_dims))
    layers = [init_bayesian_linear(k, di, do) for k, (di, do) in zip(pkeys, layer_dims)]

    # Sample one set of weights per ensemble member (training-mode semantics).
    skeys = jax.random.split(k_s, len(layers))
    sampled = [sample_layer(k, lp, n_models) for k, lp in zip(skeys, layers)]

    packed = pack_ensemble_params(sampled)

    mu, logvar = bnn_density_forward(x, packed, n_models, output_dim)
    mu, logvar = jax.block_until_ready((mu, logvar))

    mu_ref, logvar_ref = reference_forward(x, sampled, n_models)
    assert mu.shape == (batch, output_dim) and logvar.shape == (batch, output_dim)
    assert jnp.allclose(mu, mu_ref, rtol=1e-4, atol=1e-5), "mu mismatch"
    assert jnp.allclose(logvar, logvar_ref, rtol=1e-3, atol=1e-4), "logvar mismatch"

    print("KERNEL_OK")
</pallas_src>

<mosaic_0001>
module attributes {stable_mosaic.version = 11 : i64} {
  func.func @kernel(%arg0: i32, %arg1: memref<16x8xf32, #tpu.memory_space<vmem>>, %arg2: memref<8x320xf32, #tpu.memory_space<vmem>>, %arg3: memref<1x320xf32, #tpu.memory_space<vmem>>, %arg4: memref<320x320xf32, #tpu.memory_space<vmem>>, %arg5: memref<1x320xf32, #tpu.memory_space<vmem>>, %arg6: memref<320x320xf32, #tpu.memory_space<vmem>>, %arg7: memref<1x320xf32, #tpu.memory_space<vmem>>, %arg8: memref<320x40xf32, #tpu.memory_space<vmem>>, %arg9: memref<1x40xf32, #tpu.memory_space<vmem>>, %arg10: memref<16x128xf32, #tpu.memory_space<vmem>>) attributes {dimension_semantics = [#tpu.dimension_semantics<arbitrary>], iteration_bounds = array<i64: 1>, scalar_prefetch = 0 : i64, scratch_operands = 0 : i64, tpu.core_type = #tpu.core_type<tc>, window_params = [{pipeline_mode = #tpu.pipeline_mode<synchronous>, transform_indices = @transform_0, window_bounds = array<i64: 16, 8>}, {pipeline_mode = #tpu.pipeline_mode<synchronous>, transform_indices = @transform_1, window_bounds = array<i64: 8, 320>}, {pipeline_mode = #tpu.pipeline_mode<synchronous>, transform_indices = @transform_2, window_bounds = array<i64: 1, 320>}, {pipeline_mode = #tpu.pipeline_mode<synchronous>, transform_indices = @transform_3, window_bounds = array<i64: 320, 320>}, {pipeline_mode = #tpu.pipeline_mode<synchronous>, transform_indices = @transform_4, window_bounds = array<i64: 1, 320>}, {pipeline_mode = #tpu.pipeline_mode<synchronous>, transform_indices = @transform_5, window_bounds = array<i64: 320, 320>}, {pipeline_mode = #tpu.pipeline_mode<synchronous>, transform_indices = @transform_6, window_bounds = array<i64: 1, 320>}, {pipeline_mode = #tpu.pipeline_mode<synchronous>, transform_indices = @transform_7, window_bounds = array<i64: 320, 40>}, {pipeline_mode = #tpu.pipeline_mode<synchronous>, transform_indices = @transform_8, window_bounds = array<i64: 1, 40>}, {pipeline_mode = #tpu.pipeline_mode<synchronous>, transform_indices = @transform_9, window_bounds = array<i64: 16, 128>}]} {
    %c0 = arith.constant 0 : index
    %c0_0 = arith.constant 0 : index
    %0 = vector.load %arg1[%c0, %c0_0] : memref<16x8xf32, #tpu.memory_space<vmem>>, vector<16x8xf32>
    %c0_1 = arith.constant 0 : index
    %c0_2 = arith.constant 0 : index
    %1 = vector.load %arg2[%c0_1, %c0_2] : memref<8x320xf32, #tpu.memory_space<vmem>>, vector<8x320xf32>
    %cst = arith.constant dense<0.000000e+00> : vector<16x320xf32>
    %2 = tpu.matmul %0, %1, %cst {dimension_numbers = #tpu.dot_dimension_numbers<[1], [0], [0], [1], [0, 0, 1, 1], [], []>} : vector<16x8xf32>, vector<8x320xf32>, vector<16x320xf32> -> vector<16x320xf32>
    %c0_3 = arith.constant 0 : index
    %c0_4 = arith.constant 0 : index
    %3 = vector.load %arg3[%c0_3, %c0_4] : memref<1x320xf32, #tpu.memory_space<vmem>>, vector<1x320xf32>
    %4 = vector.broadcast %3 : vector<1x320xf32> to vector<16x320xf32>
    %5 = arith.addf %2, %4 : vector<16x320xf32>
    %cst_5 = arith.constant 0.000000e+00 : f32
    %6 = vector.broadcast %cst_5 : f32 to vector<16x320xf32>
    %7 = arith.maximumf %5, %6 : vector<16x320xf32>
    %c0_6 = arith.constant 0 : index
    %c0_7 = arith.constant 0 : index
    %8 = vector.load %arg4[%c0_6, %c0_7] : memref<320x320xf32, #tpu.memory_space<vmem>>, vector<320x320xf32>
    %cst_8 = arith.constant dense<0.000000e+00> : vector<16x320xf32>
    %9 = tpu.matmul %7, %8, %cst_8 {dimension_numbers = #tpu.dot_dimension_numbers<[1], [0], [0], [1], [0, 0, 1, 1], [], []>} : vector<16x320xf32>, vector<320x320xf32>, vector<16x320xf32> -> vector<16x320xf32>
    %c0_9 = arith.constant 0 : index
    %c0_10 = arith.constant 0 : index
    %10 = vector.load %arg5[%c0_9, %c0_10] : memref<1x320xf32, #tpu.memory_space<vmem>>, vector<1x320xf32>
    %11 = vector.broadcast %10 : vector<1x320xf32> to vector<16x320xf32>
    %12 = arith.addf %9, %11 : vector<16x320xf32>
    %cst_11 = arith.constant 0.000000e+00 : f32
    %13 = vector.broadcast %cst_11 : f32 to vector<16x320xf32>
    %14 = arith.maximumf %12, %13 : vector<16x320xf32>
    %c0_12 = arith.constant 0 : index
    %c0_13 = arith.constant 0 : index
    %15 = vector.load %arg6[%c0_12, %c0_13] : memref<320x320xf32, #tpu.memory_space<vmem>>, vector<320x320xf32>
    %cst_14 = arith.constant dense<0.000000e+00> : vector<16x320xf32>
    %16 = tpu.matmul %14, %15, %cst_14 {dimension_numbers = #tpu.dot_dimension_numbers<[1], [0], [0], [1], [0, 0, 1, 1], [], []>} : vector<16x320xf32>, vector<320x320xf32>, vector<16x320xf32> -> vector<16x320xf32>
    %c0_15 = arith.constant 0 : index
    %c0_16 = arith.constant 0 : index
    %17 = vector.load %arg7[%c0_15, %c0_16] : memref<1x320xf32, #tpu.memory_space<vmem>>, vector<1x320xf32>
    %18 = vector.broadcast %17 : vector<1x320xf32> to vector<16x320xf32>
    %19 = arith.addf %16, %18 : vector<16x320xf32>
    %cst_17 = arith.constant 0.000000e+00 : f32
    %20 = vector.broadcast %cst_17 : f32 to vector<16x320xf32>
    %21 = arith.maximumf %19, %20 : vector<16x320xf32>
    %c0_18 = arith.constant 0 : index
    %c0_19 = arith.constant 0 : index
    %22 = vector.load %arg8[%c0_18, %c0_19] : memref<320x40xf32, #tpu.memory_space<vmem>>, vector<320x40xf32>
    %cst_20 = arith.constant dense<0.000000e+00> : vector<16x40xf32>
    %23 = tpu.matmul %21, %22, %cst_20 {dimension_numbers = #tpu.dot_dimension_numbers<[1], [0], [0], [1], [0, 0, 1, 1], [], []>} : vector<16x320xf32>, vector<320x40xf32>, vector<16x40xf32> -> vector<16x40xf32>
    %c0_21 = arith.constant 0 : index
    %c0_22 = arith.constant 0 : index
    %24 = vector.load %arg9[%c0_21, %c0_22] : memref<1x40xf32, #tpu.memory_space<vmem>>, vector<1x40xf32>
    %25 = vector.broadcast %24 : vector<1x40xf32> to vector<16x40xf32>
    %26 = arith.addf %23, %25 : vector<16x40xf32>
    %27 = tpu.iota {dimensions = array<i32: 0>} : vector<40x4xi32>
    %28 = tpu.iota {dimensions = array<i32: 1>} : vector<40x4xi32>
    %c4_i32 = arith.constant 4 : i32
    %c0_i32 = arith.constant 0 : i32
    %29 = arith.cmpi eq, %c4_i32, %c0_i32 : i32
    %c1_i32 = arith.constant 1 : i32
    %30 = arith.select %29, %c1_i32, %c4_i32 : i32
    %31 = vector.broadcast %30 : i32 to vector<40x4xi32>
    %32 = arith.remsi %27, %31 : vector<40x4xi32>
    %c0_i32_23 = arith.constant 0 : i32
    %33 = vector.broadcast %c0_i32_23 : i32 to vector<40x4xi32>
    %34 = arith.cmpi ne, %32, %33 : vector<40x4xi32>
    %c0_i32_24 = arith.constant 0 : i32
    %35 = vector.broadcast %c0_i32_24 : i32 to vector<40x4xi32>
    %36 = arith.cmpi slt, %32, %35 : vector<40x4xi32>
    %c0_i32_25 = arith.constant 0 : i32
    %37 = arith.cmpi slt, %30, %c0_i32_25 : i32
    %38 = vector.broadcast %37 : i1 to vector<40x4xi1>
    %39 = vector.broadcast %38 : vector<40x4xi1> to vector<40x4xi1>
    %40 = arith.xori %36, %39 : vector<40x4xi1>
    %41 = arith.andi %40, %34 : vector<40x4xi1>
    %42 = vector.broadcast %30 : i32 to vector<40x4xi32>
    %43 = arith.addi %32, %42 : vector<40x4xi32>
    %44 = arith.select %41, %43, %32 : vector<40x4xi1>, vector<40x4xi32>
    %45 = arith.cmpi eq, %44, %28 : vector<40x4xi32>
    %46 = arith.extui %45 : vector<40x4xi1> to vector<40x4xi32>
    %47 = arith.sitofp %46 : vector<40x4xi32> to vector<40x4xf32>
    %48 = tpu.iota {dimensions = array<i32: 0>} : vector<4x40xi32>
    %49 = tpu.iota {dimensions = array<i32: 1>} : vector<4x40xi32>
    %c4_i32_26 = arith.constant 4 : i32
    %c0_i32_27 = arith.constant 0 : i32
    %50 = arith.cmpi eq, %c4_i32_26, %c0_i32_27 : i32
    %c1_i32_28 = arith.constant 1 : i32
    %51 = arith.select %50, %c1_i32_28, %c4_i32_26 : i32
    %52 = vector.broadcast %51 : i32 to vector<4x40xi32>
    %53 = arith.remsi %49, %52 : vector<4x40xi32>
    %c0_i32_29 = arith.constant 0 : i32
    %54 = vector.broadcast %c0_i32_29 : i32 to vector<4x40xi32>
    %55 = arith.cmpi ne, %53, %54 : vector<4x40xi32>
    %c0_i32_30 = arith.constant 0 : i32
    %56 = vector.broadcast %c0_i32_30 : i32 to vector<4x40xi32>
    %57 = arith.cmpi slt, %53, %56 : vector<4x40xi32>
    %c0_i32_31 = arith.constant 0 : i32
    %58 = arith.cmpi slt, %51, %c0_i32_31 : i32
    %59 = vector.broadcast %58 : i1 to vector<4x40xi1>
    %60 = vector.broadcast %59 : vector<4x40xi1> to vector<4x40xi1>
    %61 = arith.xori %57, %60 : vector<4x40xi1>
    %62 = arith.andi %61, %55 : vector<4x40xi1>
    %63 = vector.broadcast %51 : i32 to vector<4x40xi32>
    %64 = arith.addi %53, %63 : vector<4x40xi32>
    %65 = arith.select %62, %64, %53 : vector<4x40xi1>, vector<4x40xi32>
    %66 = arith.cmpi eq, %65, %48 : vector<4x40xi32>
    %67 = arith.extui %66 : vector<4x40xi1> to vector<4x40xi32>
    %68 = arith.sitofp %67 : vector<4x40xi32> to vector<4x40xf32>
    %cst_32 = arith.constant dense<0.000000e+00> : vector<16x4xf32>
    %69 = tpu.matmul %26, %47, %cst_32 {dimension_numbers = #tpu.dot_dimension_numbers<[1], [0], [0], [1], [0, 0, 1, 1], [], []>} : vector<16x40xf32>, vector<40x4xf32>, vector<16x4xf32> -> vector<16x4xf32>
    %cst_33 = arith.constant 1.000000e-01 : f32
    %70 = vector.broadcast %cst_33 : f32 to vector<16x4xf32>
    %71 = arith.mulf %69, %70 : vector<16x4xf32>
    %cst_34 = arith.constant dense<0.000000e+00> : vector<16x40xf32>
    %72 = tpu.matmul %71, %68, %cst_34 {dimension_numbers = #tpu.dot_dimension_numbers<[1], [0], [0], [1], [0, 0, 1, 1], [], []>} : vector<16x4xf32>, vector<4x40xf32>, vector<16x40xf32> -> vector<16x40xf32>
    %73 = arith.subf %26, %72 : vector<16x40xf32>
    %74 = arith.mulf %73, %73 : vector<16x40xf32>
    %cst_35 = arith.constant dense<0.000000e+00> : vector<16x4xf32>
    %75 = tpu.matmul %74, %47, %cst_35 {dimension_numbers = #tpu.dot_dimension_numbers<[1], [0], [0], [1], [0, 0, 1, 1], [], []>} : vector<16x40xf32>, vector<40x4xf32>, vector<16x4xf32> -> vector<16x4xf32>
    %cst_36 = arith.constant 0.111111112 : f32
    %76 = vector.broadcast %cst_36 : f32 to vector<16x4xf32>
    %77 = arith.mulf %75, %76 : vector<16x4xf32>
    %78 = math.log %77 : vector<16x4xf32>
    %cst_37 = arith.constant 0.000000e+00 : f32
    %79 = vector.broadcast %cst_37 : f32 to vector<16x120xf32>
    %80 = tpu.concatenate %71, %78, %79 in 1 : vector<16x4xf32>, vector<16x4xf32>, vector<16x120xf32> -> vector<16x128xf32>
    %c0_38 = arith.constant 0 : index
    %c0_39 = arith.constant 0 : index
    %81 = vector.load %arg10[%c0_38, %c0_39] : memref<16x128xf32, #tpu.memory_space<vmem>>, vector<16x128xf32>
    tpu.vector_store %arg10[%c0_38, %c0_39], %80 {strides = array<i32>} : memref<16x128xf32, #tpu.memory_space<vmem>>, vector<16x128xf32>,
    return
  }
  func.func @transform_0(%arg0: i32) -> (i32, i32) {
    %c0_i32 = arith.constant 0 : i32
    %c0_i32_0 = arith.constant 0 : i32
    %c0_i32_1 = arith.constant 0 : i32
    return %c0_i32, %c0_i32_0 : i32, i32
  }
  func.func @transform_1(%arg0: i32) -> (i32, i32) {
    %c0_i32 = arith.constant 0 : i32
    %c0_i32_0 = arith.constant 0 : i32
    %c0_i32_1 = arith.constant 0 : i32
    return %c0_i32, %c0_i32_0 : i32, i32
  }
  func.func @transform_2(%arg0: i32) -> (i32, i32) {
    %c0_i32 = arith.constant 0 : i32
    %c0_i32_0 = arith.constant 0 : i32
    %c0_i32_1 = arith.constant 0 : i32
    return %c0_i32, %c0_i32_0 : i32, i32
  }
  func.func @transform_3(%arg0: i32) -> (i32, i32) {
    %c0_i32 = arith.constant 0 : i32
    %c0_i32_0 = arith.constant 0 : i32
    %c0_i32_1 = arith.constant 0 : i32
    return %c0_i32, %c0_i32_0 : i32, i32
  }
  func.func @transform_4(%arg0: i32) -> (i32, i32) {
    %c0_i32 = arith.constant 0 : i32
    %c0_i32_0 = arith.constant 0 : i32
    %c0_i32_1 = arith.constant 0 : i32
    return %c0_i32, %c0_i32_0 : i32, i32
  }
  func.func @transform_5(%arg0: i32) -> (i32, i32) {
    %c0_i32 = arith.constant 0 : i32
    %c0_i32_0 = arith.constant 0 : i32
    %c0_i32_1 = arith.constant 0 : i32
    return %c0_i32, %c0_i32_0 : i32, i32
  }
  func.func @transform_6(%arg0: i32) -> (i32, i32) {
    %c0_i32 = arith.constant 0 : i32
    %c0_i32_0 = arith.constant 0 : i32
    %c0_i32_1 = arith.constant 0 : i32
    return %c0_i32, %c0_i32_0 : i32, i32
  }
  func.func @transform_7(%arg0: i32) -> (i32, i32) {
    %c0_i32 = arith.constant 0 : i32
    %c0_i32_0 = arith.constant 0 : i32
    %c0_i32_1 = arith.constant 0 : i32
    return %c0_i32, %c0_i32_0 : i32, i32
  }
  func.func @transform_8(%arg0: i32) -> (i32, i32) {
    %c0_i32 = arith.constant 0 : i32
    %c0_i32_0 = arith.constant 0 : i32
    %c0_i32_1 = arith.constant 0 : i32
    return %c0_i32, %c0_i32_0 : i32, i32
  }
  func.func @transform_9(%arg0: i32) -> (i32, i32) {
    %c0_i32 = arith.constant 0 : i32
    %c0_i32_0 = arith.constant 0 : i32
    %c0_i32_1 = arith.constant 0 : i32
    return %c0_i32, %c0_i32_0 : i32, i32
  }
}

</mosaic_0001>

<llo_original>
// kernel: tpu_custom_call.1
$region0: #{tpu_custom_call.1}
  #allocation0 [shape = 'u32[]', space=smem, size = 0x4, offset = 0x4, fixed_abs, tag = 'smem constant byte address 0x4 - core index']
  #allocation1 [shape = 'u32[144,128]{1,0:T(1,128)}', space=vmem, size = 0x12000, scoped, tag = 'internal scratch']
  %s0 = inlined_call_operand.vmem [shape: f32[16,8], index: 0, kind: input, shape index: {}]
  %s1 = inlined_call_operand.vmem [shape: f32[8,320], index: 1, kind: input, shape index: {}]
  %s2 = inlined_call_operand.vmem [shape: f32[1,320], index: 2, kind: input, shape index: {}]
  %s3 = inlined_call_operand.hbm [shape: f32[320,320], index: 3, kind: input, shape index: {}]
  %s4 = inlined_call_operand.vmem [shape: f32[1,320], index: 4, kind: input, shape index: {}]
  %s5 = inlined_call_operand.hbm [shape: f32[320,320], index: 5, kind: input, shape index: {}]
  %s6 = inlined_call_operand.vmem [shape: f32[1,320], index: 6, kind: input, shape index: {}]
  %s7 = inlined_call_operand.vmem [shape: f32[320,40], index: 7, kind: input, shape index: {}]
  %s8 = inlined_call_operand.vmem [shape: f32[1,40], index: 8, kind: input, shape index: {}]
  %s9 = inlined_call_operand.hbm [shape: f32[16,128], index: 9, kind: output, shape index: {}]
  %s10 = sld [smem:[#allocation0]]
  $region54: #{tpu_custom_call.1} parent=0
    _
  %s12 = ssub.s32 1, %s10
  %s13 = scalar_select 0, %s12, %s10
  $region1: #{tpu_custom_call.1} parent=0
    #allocation2 [shape = 'u8[491520]{0}', space=vmem, size = 0x78000, scoped, tag = 'input window, operand 3, single buffered']
    #allocation3 [shape = 's32[1]{0}', space=sflag, size = 0x4, scoped, tag = 'scoped memory for tpu_custom_call.1']
    #allocation4 [shape = 's32[1]{0}', space=sflag, size = 0x4, scoped, tag = 'scoped memory for tpu_custom_call.1']
    #allocation5 [shape = 'u8[491520]{0}', space=vmem, size = 0x78000, scoped, tag = 'input window, operand 5, single buffered']
    #allocation6 [shape = 's32[1]{0}', space=sflag, size = 0x4, scoped, tag = 'scoped memory for tpu_custom_call.1']
    #allocation7 [shape = 'u8[8192]{0}', space=vmem, size = 0x2000, scoped, tag = 'output window, operand 0, single buffered']
    %14 = vsyncpa [#allocation3], 0
    %15 = vsyncpa [#allocation6], 0
    %16 = vsyncpa [#allocation4], 0
    // Predicated region
    $region2: #{tpu_custom_call.1} parent=1 // pred_check
      _
    $region3: #{tpu_custom_call.1} parent=1 // pred_check_branch
      %18 = sbr.rel (0) target = $region5
    $region4: #{tpu_custom_call.1} parent=1 // pred_region
      _
    $region5: #{tpu_custom_call.1} parent=1 // pred_fallthru
      _
    // Predicated region
    $region6: #{tpu_custom_call.1} parent=1 // pred_check
      _
    $region7: #{tpu_custom_call.1} parent=1 // pred_check_branch
      %20 = sbr.rel (0) target = $region9
    $region8: #{tpu_custom_call.1} parent=1 // pred_region
      _
    $region9: #{tpu_custom_call.1} parent=1 // pred_fallthru
      _
    // Predicated region
    $region10: #{tpu_custom_call.1} parent=1 // pred_check
      _
    $region11: #{tpu_custom_call.1} parent=1 // pred_check_branch
      %22 = sbr.rel (0) target = $region13
    $region12: #{tpu_custom_call.1} parent=1 // pred_region
      _
    $region13: #{tpu_custom_call.1} parent=1 // pred_fallthru
      _
    // Predicated region
    $region14: #{tpu_custom_call.1} parent=1 // pred_check
      _
    $region15: #{tpu_custom_call.1} parent=1 // pred_check_branch
      %24 = sbr.rel (0) target = $region17
    $region16: #{tpu_custom_call.1} parent=1 // pred_region
      %s26 = ssub.s32 15360, 15360
      %27 = vsyncadd [#allocation3], %s26
      %s28 = sshll.u32 [#allocation2], 4
      %s29 = int_to_ptr.vmem [resolvable:$true] %s28
      %34 = dma.hbm_to_vmem [thread:$0]  %s3, 15360, %s29, [#allocation3], 384, 384, 24
    $region17: #{tpu_custom_call.1} parent=1 // pred_fallthru
      _
    // Predicated region
    $region18: #{tpu_custom_call.1} parent=1 // pred_check
      _
    $region19: #{tpu_custom_call.1} parent=1 // pred_check_branch
      %36 = sbr.rel (0) target = $region21
    $region20: #{tpu_custom_call.1} parent=1 // pred_region
      _
    $region21: #{tpu_custom_call.1} parent=1 // pred_fallthru
      _
    // Predicated region
    $region22: #{tpu_custom_call.1} parent=1 // pred_check
      _
    $region23: #{tpu_custom_call.1} parent=1 // pred_check_branch
      %38 = sbr.rel (0) target = $region25
    $region24: #{tpu_custom_call.1} parent=1 // pred_region
      %s40 = ssub.s32 15360, 15360
      %41 = vsyncadd [#allocation6], %s40
      %s42 = sshll.u32 [#allocation5], 4
      %s43 = int_to_ptr.vmem [resolvable:$true] %s42
      %48 = dma.hbm_to_vmem [thread:$0]  %s5, 15360, %s43, [#allocation6], 384, 384, 24
    $region25: #{tpu_custom_call.1} parent=1 // pred_fallthru
      _
    // Predicated region
    $region26: #{tpu_custom_call.1} parent=1 // pred_check
      _
    $region27: #{tpu_custom_call.1} parent=1 // pred_check_branch
      %50 = sbr.rel (0) target = $region29
    $region28: #{tpu_custom_call.1} parent=1 // pred_region
      _
    $region29: #{tpu_custom_call.1} parent=1 // pred_fallthru
      _
    // Predicated region
    $region30: #{tpu_custom_call.1} parent=1 // pred_check
      _
    $region31: #{tpu_custom_call.1} parent=1 // pred_check_branch
      %52 = sbr.rel (0) target = $region33
    $region32: #{tpu_custom_call.1} parent=1 // pred_region
      _
    $region33: #{tpu_custom_call.1} parent=1 // pred_fallthru
      _
    // Predicated region
    $region34: #{tpu_custom_call.1} parent=1 // pred_check
      _
    $region35: #{tpu_custom_call.1} parent=1 // pred_check_branch
      %54 = sbr.rel (0) target = $region37
    $region36: #{tpu_custom_call.1} parent=1 // pred_region
      _
    $region37: #{tpu_custom_call.1} parent=1 // pred_fallthru
      _
    // Predicated region
    $region38: #{tpu_custom_call.1} parent=1 // pred_check
      _
    $region39: #{tpu_custom_call.1} parent=1 // pred_check_branch
      %56 = sbr.rel (0) target = $region41
    $region40: #{tpu_custom_call.1} parent=1 // pred_region
      %57 = dma.done [#allocation3], 15360
    $region41: #{tpu_custom_call.1} parent=1 // pred_fallthru
      _
    // Predicated region
    $region42: #{tpu_custom_call.1} parent=1 // pred_check
      _
    $region43: #{tpu_custom_call.1} parent=1 // pred_check_branch
      %59 = sbr.rel (0) target = $region45
    $region44: #{tpu_custom_call.1} parent=1 // pred_region
      %60 = dma.done [#allocation6], 15360
    $region45: #{tpu_custom_call.1} parent=1 // pred_fallthru
      _
    %v61 = vld [vmem:[%s0] sm:$0xff]
    %v62 = vld [vmem:[%s0 + $0x8] sm:$0xff]
    %v63 = vld [vmem:[%s1] sm:$0xff]
    %v64 = vld [vmem:[%s1 + $0x8] sm:$0xff]
    %v65 = vld [vmem:[%s1 + $0x10] sm:$0xff]
    %v66 = vld [vmem:[%s2] sm:$0x7]
    %v68 = vlaneseq
    %v69 = vshrl.u32 %v68, 7
    %v70 = vsub.s32 0, %v69
    %v71 = vrot.slane %v66, %v70
    %v72 = vlaneseq
    %v73 = vshrl.u32 %v72, 7
    %v74 = vsub.s32 1, %v73
    %v75 = vrot.slane %v66, %v74
    %v76 = vlaneseq
    %v77 = vshrl.u32 %v76, 7
    %v78 = vsub.s32 2, %v77
    %v79 = vrot.slane %v66, %v78
    %vm83 = vcmask 64512
    %v85 = vsel %vm83, %v61, 0
    %v88 = vsel %vm83, %v62, 0
    %90 = vmatprep.subr.mxu0 %v64
    %91 = vmatpush1.msra.mxu0 %v63
    %92 = vmatprep.subr.mxu0 0.0
    %93 = vmatpush1.msra.mxu0 0.0
    %94 = vmatprep.subr.mxu0 0.0
    %95 = vmatpush1.msra.mxu0 0.0
    %96 = vmatprep.subr.mxu0 0.0
    %97 = vmatpush1.msra.mxu0 0.0
    %98 = vmatprep.subr.mxu0 0.0
    %99 = vmatpush1.msra.mxu0 0.0
    %100 = vmatprep.subr.mxu0 0.0
    %101 = vmatpush1.msra.mxu0 0.0
    %102 = vmatprep.subr.mxu0 0.0
    %103 = vmatpush1.msra.mxu0 0.0
    %104 = vmatprep.subr.mxu0 0.0
    %105 = vmatpush1.msra.mxu0 0.0
    %106 = vmatprep.subr.mxu0 0.0
    %107 = vmatpush1.msra.mxu0 0.0
    %108 = vmatprep.subr.mxu0 0.0
    %109 = vmatpush1.msra.mxu0 0.0
    %110 = vmatprep.subr.mxu0 0.0
    %111 = vmatpush1.msra.mxu0 0.0
    %112 = vmatprep.subr.mxu0 0.0
    %113 = vmatpush1.msra.mxu0 0.0
    %114 = vmatprep.subr.mxu0 0.0
    %115 = vmatpush1.msra.mxu0 0.0
    %116 = vmatprep.subr.mxu0 0.0
    %117 = vmatpush1.msra.mxu0 0.0
    %118 = vmatprep.subr.mxu0 0.0
    %119 = vmatpush1.msra.mxu0 0.0
    %120 = vmatprep.subr.mxu0 0.0
    %121 = vmatpush1.msra.mxu0 0.0
    %122 = vmatprep.subr.mxu0 0.0
    %123 = vmatpush1.msra.mxu0 0.0
    %124 = vmatprep.subr.mxu0 0.0
    %125 = vmatpush1.msra.mxu0 0.0
    %126 = vmatprep.subr.mxu0 0.0
    %127 = vmatpush1.msra.mxu0 0.0
    %128 = vmatprep.subr.mxu0 0.0
    %129 = vmatpush1.msra.mxu0 0.0
    %130 = vmatprep.subr.mxu0 0.0
    %131 = vmatpush1.msra.mxu0 0.0
    %132 = vmatprep.subr.mxu0 0.0
    %133 = vmatpush1.msra.mxu0 0.0
    %134 = vmatprep.subr.mxu0 0.0
    %135 = vmatpush1.msra.mxu0 0.0
    %136 = vmatprep.subr.mxu0 0.0
    %137 = vmatpush1.msra.mxu0 0.0
    %138 = vmatprep.subr.mxu0 0.0
    %139 = vmatpush1.msra.mxu0 0.0
    %140 = vmatprep.subr.mxu0 0.0
    %141 = vmatpush1.msra.mxu0 0.0
    %142 = vmatprep.subr.mxu0 0.0
    %143 = vmatpush1.msra.mxu0 0.0
    %144 = vmatprep.subr.mxu0 0.0
    %145 = vmatpush1.msra.mxu0 0.0
    %146 = vmatprep.subr.mxu0 0.0
    %147 = vmatpush1.msra.mxu0 0.0
    %148 = vmatprep.subr.mxu0 0.0
    %149 = vmatpush1.msra.mxu0 0.0
    %150 = vmatprep.subr.mxu0 0.0
    %151 = vmatpush1.msra.mxu0 0.0
    %152 = vmatprep.subr.mxu0 0.0
    %153 = vmatpush1.msra.mxu0 0.0
    %154 = vmatprep.mubr.f32.mxu0 0.0
    %155 = vmatmul.mubr.f32.gmra.mrb[0].mxu0 %v85
    %v156 = vpop.f32.mrb[0].mxu0
    %v157 = vadd.f32 %v71, %v156
    %v158 = vpop.f32.mrb[0].mxu0
    %v159 = vadd.f32 %v75, %v158
    %160 = vmatprep.mubr.f32.mxu0 0.0
    %161 = vmatmul.mubr.f32.gmra.mrb[0].mxu0 %v88
    %v162 = vpop.f32.mrb[0].mxu0
    %v163 = vadd.f32 %v71, %v162
    %v164 = vpop.f32.mrb[0].mxu0
    %v165 = vadd.f32 %v75, %v164
    %166 = vdwg.mxu0
    %167 = vmatprep.subr.mxu0 0.0
    %168 = vmatpush1.msra.mxu0 %v65
    %169 = vmatprep.subr.mxu0 0.0
    %170 = vmatpush1.msra.mxu0 0.0
    %171 = vmatprep.subr.mxu0 0.0
    %172 = vmatpush1.msra.mxu0 0.0
    %173 = vmatprep.subr.mxu0 0.0
    %174 = vmatpush1.msra.mxu0 0.0
    %175 = vmatprep.subr.mxu0 0.0
    %176 = vmatpush1.msra.mxu0 0.0
    %177 = vmatprep.subr.mxu0 0.0
    %178 = vmatpush1.msra.mxu0 0.0
    %179 = vmatprep.subr.mxu0 0.0
    %180 = vmatpush1.msra.mxu0 0.0
    %181 = vmatprep.subr.mxu0 0.0
    %182 = vmatpush1.msra.mxu0 0.0
    %183 = vmatprep.subr.mxu0 0.0
    %184 = vmatpush1.msra.mxu0 0.0
    %185 = vmatprep.subr.mxu0 0.0
    %186 = vmatpush1.msra.mxu0 0.0
    %187 = vmatprep.subr.mxu0 0.0
    %188 = vmatpush1.msra.mxu0 0.0
    %189 = vmatprep.subr.mxu0 0.0
    %190 = vmatpush1.msra.mxu0 0.0
    %191 = vmatprep.subr.mxu0 0.0
    %192 = vmatpush1.msra.mxu0 0.0
    %193 = vmatprep.subr.mxu0 0.0
    %194 = vmatpush1.msra.mxu0 0.0
    %195 = vmatprep.subr.mxu0 0.0
    %196 = vmatpush1.msra.mxu0 0.0
    %197 = vmatprep.subr.mxu0 0.0
    %198 = vmatpush1.msra.mxu0 0.0
    %199 = vmatprep.subr.mxu0 0.0
    %200 = vmatpush1.msra.mxu0 0.0
    %201 = vmatprep.subr.mxu0 0.0
    %202 = vmatpush1.msra.mxu0 0.0
    %203 = vmatprep.subr.mxu0 0.0
    %204 = vmatpush1.msra.mxu0 0.0
    %205 = vmatprep.subr.mxu0 0.0
    %206 = vmatpush1.msra.mxu0 0.0
    %207 = vmatprep.subr.mxu0 0.0
    %208 = vmatpush1.msra.mxu0 0.0
    %209 = vmatprep.subr.mxu0 0.0
    %210 = vmatpush1.msra.mxu0 0.0
    %211 = vmatprep.subr.mxu0 0.0
    %212 = vmatpush1.msra.mxu0 0.0
    %213 = vmatprep.subr.mxu0 0.0
    %214 = vmatpush1.msra.mxu0 0.0
    %215 = vmatprep.subr.mxu0 0.0
    %216 = vmatpush1.msra.mxu0 0.0
    %217 = vmatprep.subr.mxu0 0.0
    %218 = vmatpush1.msra.mxu0 0.0
    %219 = vmatprep.subr.mxu0 0.0
    %220 = vmatpush1.msra.mxu0 0.0
    %221 = vmatprep.subr.mxu0 0.0
    %222 = vmatpush1.msra.mxu0 0.0
    %223 = vmatprep.subr.mxu0 0.0
    %224 = vmatpush1.msra.mxu0 0.0
    %225 = vmatprep.subr.mxu0 0.0
    %226 = vmatpush1.msra.mxu0 0.0
    %227 = vmatprep.subr.mxu0 0.0
    %228 = vmatpush1.msra.mxu0 0.0
    %229 = vmatprep.subr.mxu0 0.0
    %230 = vmatpush1.msra.mxu0 0.0
    %231 = vmatprep.mubr.f32.mxu0 0.0
    %232 = vmatmul.mubr.f32.gmra.mrb[0].mxu0 %v85
    %v233 = vpop.f32.mrb[0].mxu0
    %v234 = vadd.f32 %v79, %v233
    %v235 = vpop.f32.mrb[0].mxu0
    %236 = vmatprep.mubr.f32.mxu0 0.0
    %237 = vmatmul.mubr.f32.gmra.mrb[0].mxu0 %v88
    %v238 = vpop.f32.mrb[0].mxu0
    %v239 = vadd.f32 %v79, %v238
    %v240 = vpop.f32.mrb[0].mxu0
    %241 = vdwg.mxu0
    %v242 = vmax.f32 %v157, 0.0
    %v243 = vmax.f32 %v159, 0.0
    %v244 = vmax.f32 %v234, 0.0
    %v245 = vmax.f32 %v163, 0.0
    %v246 = vmax.f32 %v165, 0.0
    %v247 = vmax.f32 %v239, 0.0
    %v248 = vld [vmem:[#allocation2] sm:$0xff]
    %v249 = vld [vmem:[#allocation2 + $0x8] sm:$0xff]
    %v250 = vld [vmem:[#allocation2 + $0x10] sm:$0xff]
    %v251 = vld [vmem:[#allocation2 + $0x18] sm:$0xff]
    %v252 = vld [vmem:[#allocation2 + $0x20] sm:$0xff]
    %v253 = vld [vmem:[#allocation2 + $0x28] sm:$0xff]
    %v254 = vld [vmem:[#allocation2 + $0x30] sm:$0xff]
    %v255 = vld [vmem:[#allocation2 + $0x38] sm:$0xff]
    %v256 = vld [vmem:[#allocation2 + $0x40] sm:$0xff]
    %v257 = vld [vmem:[#allocation2 + $0x48] sm:$0xff]
    %v258 = vld [vmem:[#allocation2 + $0x50] sm:$0xff]
    %v259 = vld [vmem:[#allocation2 + $0x58] sm:$0xff]
    %v260 = vld [vmem:[#allocation2 + $0x60] sm:$0xff]
    %v261 = vld [vmem:[#allocation2 + $0x68] sm:$0xff]
    %v262 = vld [vmem:[#allocation2 + $0x70] sm:$0xff]
    %v263 = vld [vmem:[#allocation2 + $0x78] sm:$0xff]
    %v264 = vld [vmem:[#allocation2 + $0x80] sm:$0xff]
    %v265 = vld [vmem:[#allocation2 + $0x88] sm:$0xff]
    %v266 = vld [vmem:[#allocation2 + $0x90] sm:$0xff]
    %v267 = vld [vmem:[#allocation2 + $0x98] sm:$0xff]
    %v268 = vld [vmem:[#allocation2 + $0xa0] sm:$0xff]
    %v269 = vld [vmem:[#allocation2 + $0xa8] sm:$0xff]
    %v270 = vld [vmem:[#allocation2 + $0xb0] sm:$0xff]
    %v271 = vld [vmem:[#allocation2 + $0xb8] sm:$0xff]
    %v272 = vld [vmem:[#allocation2 + $0xc0] sm:$0xff]
    %v273 = vld [vmem:[#allocation2 + $0xc8] sm:$0xff]
    %v274 = vld [vmem:[#allocation2 + $0xd0] sm:$0xff]
    %v275 = vld [vmem:[#allocation2 + $0xd8] sm:$0xff]
    %v276 = vld [vmem:[#allocation2 + $0xe0] sm:$0xff]
    %v277 = vld [vmem:[#allocation2 + $0xe8] sm:$0xff]
    %v278 = vld [vmem:[#allocation2 + $0xf0] sm:$0xff]
    %v279 = vld [vmem:[#allocation2 + $0xf8] sm:$0xff]
    %v280 = vld [vmem:[#allocation2 + $0x100] sm:$0xff]
    %v281 = vld [vmem:[#allocation2 + $0x108] sm:$0xff]
    %v282 = vld [vmem:[#allocation2 + $0x110] sm:$0xff]
    %v283 = vld [vmem:[#allocation2 + $0x118] sm:$0xff]
    %v284 = vld [vmem:[#allocation2 + $0x120] sm:$0xff]
    %v285 = vld [vmem:[#allocation2 + $0x128] sm:$0xff]
    %v286 = vld [vmem:[#allocation2 + $0x130] sm:$0xff]
    %v287 = vld [vmem:[#allocation2 + $0x138] sm:$0xff]
    %v288 = vld [vmem:[#allocation2 + $0x140] sm:$0xff]
    %v289 = vld [vmem:[#allocation2 + $0x148] sm:$0xff]
    %v290 = vld [vmem:[#allocation2 + $0x150] sm:$0xff]
    %v291 = vld [vmem:[#allocation2 + $0x158] sm:$0xff]
    %v292 = vld [vmem:[#allocation2 + $0x160] sm:$0xff]
    %v293 = vld [vmem:[#allocation2 + $0x168] sm:$0xff]
    %v294 = vld [vmem:[#allocation2 + $0x170] sm:$0xff]
    %v295 = vld [vmem:[#allocation2 + $0x178] sm:$0xff]
    %v296 = vld [vmem:[#allocation2 + $0x180] sm:$0xff]
    %v297 = vld [vmem:[#allocation2 + $0x188] sm:$0xff]
    %v298 = vld [vmem:[#allocation2 + $0x190] sm:$0xff]
    %v299 = vld [vmem:[#allocation2 + $0x198] sm:$0xff]
    %v300 = vld [vmem:[#allocation2 + $0x1a0] sm:$0xff]
    %v301 = vld [vmem:[#allocation2 + $0x1a8] sm:$0xff]
    %v302 = vld [vmem:[#allocation2 + $0x1b0] sm:$0xff]
    %v303 = vld [vmem:[#allocation2 + $0x1b8] sm:$0xff]
    %v304 = vld [vmem:[#allocation2 + $0x1c0] sm:$0xff]
    %v305 = vld [vmem:[#allocation2 + $0x1c8] sm:$0xff]
    %v306 = vld [vmem:[#allocation2 + $0x1d0] sm:$0xff]
    %v307 = vld [vmem:[#allocation2 + $0x1d8] sm:$0xff]
    %v308 = vld [vmem:[#allocation2 + $0x1e0] sm:$0xff]
    %v309 = vld [vmem:[#allocation2 + $0x1e8] sm:$0xff]
    %v310 = vld [vmem:[#allocation2 + $0x1f0] sm:$0xff]
    %v311 = vld [vmem:[#allocation2 + $0x1f8] sm:$0xff]
    %v312 = vld [vmem:[#allocation2 + $0x200] sm:$0xff]
    %v313 = vld [vmem:[#allocation2 + $0x208] sm:$0xff]
    %v314 = vld [vmem:[#allocation2 + $0x210] sm:$0xff]
    %v315 = vld [vmem:[#allocation2 + $0x218] sm:$0xff]
    %v316 = vld [vmem:[#allocation2 + $0x220] sm:$0xff]
    %v317 = vld [vmem:[#allocation2 + $0x228] sm:$0xff]
    %v318 = vld [vmem:[#allocation2 + $0x230] sm:$0xff]
    %v319 = vld [vmem:[#allocation2 + $0x238] sm:$0xff]
    %v320 = vld [vmem:[#allocation2 + $0x240] sm:$0xff]
    %v321 = vld [vmem:[#allocation2 + $0x248] sm:$0xff]
    %v322 = vld [vmem:[#allocation2 + $0x250] sm:$0xff]
    %v323 = vld [vmem:[#allocation2 + $0x258] sm:$0xff]
    %v324 = vld [vmem:[#allocation2 + $0x260] sm:$0xff]
    %v325 = vld [vmem:[#allocation2 + $0x268] sm:$0xff]
    %v326 = vld [vmem:[#allocation2 + $0x270] sm:$0xff]
    %v327 = vld [vmem:[#allocation2 + $0x278] sm:$0xff]
    %v328 = vld [vmem:[#allocation2 + $0x280] sm:$0xff]
    %v329 = vld [vmem:[#allocation2 + $0x288] sm:$0xff]
    %v330 = vld [vmem:[#allocation2 + $0x290] sm:$0xff]
    %v331 = vld [vmem:[#allocation2 + $0x298] sm:$0xff]
    %v332 = vld [vmem:[#allocation2 + $0x2a0] sm:$0xff]
    %v333 = vld [vmem:[#allocation2 + $0x2a8] sm:$0xff]
    %v334 = vld [vmem:[#allocation2 + $0x2b0] sm:$0xff]
    %v335 = vld [vmem:[#allocation2 + $0x2b8] sm:$0xff]
    %v336 = vld [vmem:[#allocation2 + $0x2c0] sm:$0xff]
    %v337 = vld [vmem:[#allocation2 + $0x2c8] sm:$0xff]
    %v338 = vld [vmem:[#allocation2 + $0x2d0] sm:$0xff]
    %v339 = vld [vmem:[#allocation2 + $0x2d8] sm:$0xff]
    %v340 = vld [vmem:[#allocation2 + $0x2e0] sm:$0xff]
    %v341 = vld [vmem:[#allocation2 + $0x2e8] sm:$0xff]
    %v342 = vld [vmem:[#allocation2 + $0x2f0] sm:$0xff]
    %v343 = vld [vmem:[#allocation2 + $0x2f8] sm:$0xff]
    %v344 = vld [vmem:[#allocation2 + $0x300] sm:$0xff]
    %v345 = vld [vmem:[#allocation2 + $0x308] sm:$0xff]
    %v346 = vld [vmem:[#allocation2 + $0x310] sm:$0xff]
    %v347 = vld [vmem:[#allocation2 + $0x318] sm:$0xff]
    %v348 = vld [vmem:[#allocation2 + $0x320] sm:$0xff]
    %v349 = vld [vmem:[#allocation2 + $0x328] sm:$0xff]
    %v350 = vld [vmem:[#allocation2 + $0x330] sm:$0xff]
    %v351 = vld [vmem:[#allocation2 + $0x338] sm:$0xff]
    %v352 = vld [vmem:[#allocation2 + $0x340] sm:$0xff]
    %v353 = vld [vmem:[#allocation2 + $0x348] sm:$0xff]
    %v354 = vld [vmem:[#allocation2 + $0x350] sm:$0xff]
    %v355 = vld [vmem:[#allocation2 + $0x358] sm:$0xff]
    %v356 = vld [vmem:[#allocation2 + $0x360] sm:$0xff]
    %v357 = vld [vmem:[#allocation2 + $0x368] sm:$0xff]
    %v358 = vld [vmem:[#allocation2 + $0x370] sm:$0xff]
    %v359 = vld [vmem:[#allocation2 + $0x378] sm:$0xff]
    %v360 = vld [vmem:[#allocation2 + $0x380] sm:$0xff]
    %v361 = vld [vmem:[#allocation2 + $0x388] sm:$0xff]
    %v362 = vld [vmem:[#allocation2 + $0x390] sm:$0xff]
    %v363 = vld [vmem:[#allocation2 + $0x398] sm:$0xff]
    %v364 = vld [vmem:[#allocation2 + $0x3a0] sm:$0xff]
    %v365 = vld [vmem:[#allocation2 + $0x3a8] sm:$0xff]
    %v366 = vld [vmem:[#allocation2 + $0x3b0] sm:$0xff]
    %v367 = vld [vmem:[#allocation2 + $0x3b8] sm:$0xff]
    %v368 = vld [vmem:[%s4] sm:$0x7]
    %v370 = vlaneseq
    %v371 = vshrl.u32 %v370, 7
    %v372 = vsub.s32 0, %v371
    %v373 = vrot.slane %v368, %v372
    %v374 = vlaneseq
    %v375 = vshrl.u32 %v374, 7
    %v376 = vsub.s32 1, %v375
    %v377 = vrot.slane %v368, %v376
    %v378 = vlaneseq
    %v379 = vshrl.u32 %v378, 7
    %v380 = vsub.s32 2, %v379
    %v381 = vrot.slane %v368, %v380
    %vm385 = vcmask 523264
    %v387 = vsel %vm385, %v244, 0
    %v390 = vsel %vm385, %v247, 0
    %392 = vmatprep.subr.mxu0 %v249
    %393 = vmatpush1.msra.mxu0 %v248
    %394 = vmatprep.subr.mxu0 %v252
    %395 = vmatpush1.msra.mxu0 %v251
    %396 = vmatprep.subr.mxu0 %v255
    %397 = vmatpush1.msra.mxu0 %v254
    %398 = vmatprep.subr.mxu0 %v258
    %399 = vmatpush1.msra.mxu0 %v257
    %400 = vmatprep.subr.mxu0 %v261
    %401 = vmatpush1.msra.mxu0 %v260
    %402 = vmatprep.subr.mxu0 %v264
    %403 = vmatpush1.msra.mxu0 %v263
    %404 = vmatprep.subr.mxu0 %v267
    %405 = vmatpush1.msra.mxu0 %v266
    %406 = vmatprep.subr.mxu0 %v270
    %407 = vmatpush1.msra.mxu0 %v269
    %408 = vmatprep.subr.mxu0 %v273
    %409 = vmatpush1.msra.mxu0 %v272
    %410 = vmatprep.subr.mxu0 %v276
    %411 = vmatpush1.msra.mxu0 %v275
    %412 = vmatprep.subr.mxu0 %v279
    %413 = vmatpush1.msra.mxu0 %v278
    %414 = vmatprep.subr.mxu0 %v282
    %415 = vmatpush1.msra.mxu0 %v281
    %416 = vmatprep.subr.mxu0 %v285
    %417 = vmatpush1.msra.mxu0 %v284
    %418 = vmatprep.subr.mxu0 %v288
    %419 = vmatpush1.msra.mxu0 %v287
    %420 = vmatprep.subr.mxu0 %v291
    %421 = vmatpush1.msra.mxu0 %v290
    %422 = vmatprep.subr.mxu0 %v294
    %423 = vmatpush1.msra.mxu0 %v293
    %424 = vmatprep.subr.mxu0 %v297
    %425 = vmatpush1.msra.mxu0 %v296
    %426 = vmatprep.subr.mxu0 %v300
    %427 = vmatpush1.msra.mxu0 %v299
    %428 = vmatprep.subr.mxu0 %v303
    %429 = vmatpush1.msra.mxu0 %v302
    %430 = vmatprep.subr.mxu0 %v306
    %431 = vmatpush1.msra.mxu0 %v305
    %432 = vmatprep.subr.mxu0 %v309
    %433 = vmatpush1.msra.mxu0 %v308
    %434 = vmatprep.subr.mxu0 %v312
    %435 = vmatpush1.msra.mxu0 %v311
    %436 = vmatprep.subr.mxu0 %v315
    %437 = vmatpush1.msra.mxu0 %v314
    %438 = vmatprep.subr.mxu0 %v318
    %439 = vmatpush1.msra.mxu0 %v317
    %440 = vmatprep.subr.mxu0 %v321
    %441 = vmatpush1.msra.mxu0 %v320
    %442 = vmatprep.subr.mxu0 %v324
    %443 = vmatpush1.msra.mxu0 %v323
    %444 = vmatprep.subr.mxu0 %v327
    %445 = vmatpush1.msra.mxu0 %v326
    %446 = vmatprep.subr.mxu0 %v330
    %447 = vmatpush1.msra.mxu0 %v329
    %448 = vmatprep.subr.mxu0 %v333
    %449 = vmatpush1.msra.mxu0 %v332
    %450 = vmatprep.subr.mxu0 %v336
    %451 = vmatpush1.msra.mxu0 %v335
    %452 = vmatprep.subr.mxu0 %v339
    %453 = vmatpush1.msra.mxu0 %v338
    %454 = vmatprep.subr.mxu0 %v342
    %455 = vmatpush1.msra.mxu0 %v341
    %456 = vmatprep.mubr.f32.mxu0 %v243
    %457 = vmatmul.mubr.f32.gmra.mrb[0].mxu0 %v242
    %v458 = vpop.f32.mrb[0].mxu0
    %v459 = vadd.f32 %v373, %v458
    %v460 = vpop.f32.mrb[0].mxu0
    %v461 = vadd.f32 %v377, %v460
    %462 = vmatprep.mubr.f32.mxu0 %v246
    %463 = vmatmul.mubr.f32.gmra.mrb[0].mxu0 %v245
    %v464 = vpop.f32.mrb[0].mxu0
    %v465 = vadd.f32 %v373, %v464
    %v466 = vpop.f32.mrb[0].mxu0
    %v467 = vadd.f32 %v377, %v466
    %468 = vdwg.mxu0
    %469 = vmatprep.subr.mxu0 %v345
    %470 = vmatpush1.msra.mxu0 %v344
    %471 = vmatprep.subr.mxu0 %v348
    %472 = vmatpush1.msra.mxu0 %v347
    %473 = vmatprep.subr.mxu0 %v351
    %474 = vmatpush1.msra.mxu0 %v350
    %475 = vmatprep.subr.mxu0 %v354
    %476 = vmatpush1.msra.mxu0 %v353
    %477 = vmatprep.subr.mxu0 %v357
    %478 = vmatpush1.msra.mxu0 %v356
    %479 = vmatprep.subr.mxu0 %v360
    %480 = vmatpush1.msra.mxu0 %v359
    %481 = vmatprep.subr.mxu0 %v363
    %482 = vmatpush1.msra.mxu0 %v362
    %483 = vmatprep.subr.mxu0 %v366
    %484 = vmatpush1.msra.mxu0 %v365
    %485 = vmatprep.subr.mxu0 0.0
    %486 = vmatpush1.msra.mxu0 0.0
    %487 = vmatprep.subr.mxu0 0.0
    %488 = vmatpush1.msra.mxu0 0.0
    %489 = vmatprep.subr.mxu0 0.0
    %490 = vmatpush1.msra.mxu0 0.0
    %491 = vmatprep.subr.mxu0 0.0
    %492 = vmatpush1.msra.mxu0 0.0
    %493 = vmatprep.subr.mxu0 0.0
    %494 = vmatpush1.msra.mxu0 0.0
    %495 = vmatprep.subr.mxu0 0.0
    %496 = vmatpush1.msra.mxu0 0.0
    %497 = vmatprep.subr.mxu0 0.0
    %498 = vmatpush1.msra.mxu0 0.0
    %499 = vmatprep.subr.mxu0 0.0
    %500 = vmatpush1.msra.mxu0 0.0
    %501 = vmatprep.subr.mxu0 0.0
    %502 = vmatpush1.msra.mxu0 0.0
    %503 = vmatprep.subr.mxu0 0.0
    %504 = vmatpush1.msra.mxu0 0.0
    %505 = vmatprep.subr.mxu0 0.0
    %506 = vmatpush1.msra.mxu0 0.0
    %507 = vmatprep.subr.mxu0 0.0
    %508 = vmatpush1.msra.mxu0 0.0
    %509 = vmatprep.subr.mxu0 0.0
    %510 = vmatpush1.msra.mxu0 0.0
    %511 = vmatprep.subr.mxu0 0.0
    %512 = vmatpush1.msra.mxu0 0.0
    %513 = vmatprep.subr.mxu0 0.0
    %514 = vmatpush1.msra.mxu0 0.0
    %515 = vmatprep.subr.mxu0 0.0
    %516 = vmatpush1.msra.mxu0 0.0
    %517 = vmatprep.subr.mxu0 0.0
    %518 = vmatpush1.msra.mxu0 0.0
    %519 = vmatprep.subr.mxu0 0.0
    %520 = vmatpush1.msra.mxu0 0.0
    %521 = vmatprep.subr.mxu0 0.0
    %522 = vmatpush1.msra.mxu0 0.0
    %523 = vmatprep.subr.mxu0 0.0
    %524 = vmatpush1.msra.mxu0 0.0
    %525 = vmatprep.subr.mxu0 0.0
    %526 = vmatpush1.msra.mxu0 0.0
    %527 = vmatprep.subr.mxu0 0.0
    %528 = vmatpush1.msra.mxu0 0.0
    %529 = vmatprep.subr.mxu0 0.0
    %530 = vmatpush1.msra.mxu0 0.0
    %531 = vmatprep.subr.mxu0 0.0
    %532 = vmatpush1.msra.mxu0 0.0
    %533 = vmatprep.mubr.f32.mxu0 0.0
    %534 = vmatmul.mubr.f32.gmra.mrb[0].mxu0 %v387
    %v535 = vpop.f32.mrb[0].mxu0
    %v536 = vadd.f32 %v459, %v535
    %v537 = vpop.f32.mrb[0].mxu0
    %v538 = vadd.f32 %v461, %v537
    %539 = vmatprep.mubr.f32.mxu0 0.0
    %540 = vmatmul.mubr.f32.gmra.mrb[0].mxu0 %v390
    %v541 = vpop.f32.mrb[0].mxu0
    %v542 = vadd.f32 %v465, %v541
    %v543 = vpop.f32.mrb[0].mxu0
    %v544 = vadd.f32 %v467, %v543
    %545 = vdwg.mxu0
    %546 = vmatprep.subr.mxu0 0.0
    %547 = vmatpush1.msra.mxu0 %v250
    %548 = vmatprep.subr.mxu0 0.0
    %549 = vmatpush1.msra.mxu0 %v253
    %550 = vmatprep.subr.mxu0 0.0
    %551 = vmatpush1.msra.mxu0 %v256
    %552 = vmatprep.subr.mxu0 0.0
    %553 = vmatpush1.msra.mxu0 %v259
    %554 = vmatprep.subr.mxu0 0.0
    %555 = vmatpush1.msra.mxu0 %v262
    %556 = vmatprep.subr.mxu0 0.0
    %557 = vmatpush1.msra.mxu0 %v265
    %558 = vmatprep.subr.mxu0 0.0
    %559 = vmatpush1.msra.mxu0 %v268
    %560 = vmatprep.subr.mxu0 0.0
    %561 = vmatpush1.msra.mxu0 %v271
    %562 = vmatprep.subr.mxu0 0.0
    %563 = vmatpush1.msra.mxu0 %v274
    %564 = vmatprep.subr.mxu0 0.0
    %565 = vmatpush1.msra.mxu0 %v277
    %566 = vmatprep.subr.mxu0 0.0
    %567 = vmatpush1.msra.mxu0 %v280
    %568 = vmatprep.subr.mxu0 0.0
    %569 = vmatpush1.msra.mxu0 %v283
    %570 = vmatprep.subr.mxu0 0.0
    %571 = vmatpush1.msra.mxu0 %v286
    %572 = vmatprep.subr.mxu0 0.0
    %573 = vmatpush1.msra.mxu0 %v289
    %574 = vmatprep.subr.mxu0 0.0
    %575 = vmatpush1.msra.mxu0 %v292
    %576 = vmatprep.subr.mxu0 0.0
    %577 = vmatpush1.msra.mxu0 %v295
    %578 = vmatprep.subr.mxu0 0.0
    %579 = vmatpush1.msra.mxu0 %v298
    %580 = vmatprep.subr.mxu0 0.0
    %581 = vmatpush1.msra.mxu0 %v301
    %582 = vmatprep.subr.mxu0 0.0
    %583 = vmatpush1.msra.mxu0 %v304
    %584 = vmatprep.subr.mxu0 0.0
    %585 = vmatpush1.msra.mxu0 %v307
    %586 = vmatprep.subr.mxu0 0.0
    %587 = vmatpush1.msra.mxu0 %v310
    %588 = vmatprep.subr.mxu0 0.0
    %589 = vmatpush1.msra.mxu0 %v313
    %590 = vmatprep.subr.mxu0 0.0
    %591 = vmatpush1.msra.mxu0 %v316
    %592 = vmatprep.subr.mxu0 0.0
    %593 = vmatpush1.msra.mxu0 %v319
    %594 = vmatprep.subr.mxu0 0.0
    %595 = vmatpush1.msra.mxu0 %v322
    %596 = vmatprep.subr.mxu0 0.0
    %597 = vmatpush1.msra.mxu0 %v325
    %598 = vmatprep.subr.mxu0 0.0
    %599 = vmatpush1.msra.mxu0 %v328
    %600 = vmatprep.subr.mxu0 0.0
    %601 = vmatpush1.msra.mxu0 %v331
    %602 = vmatprep.subr.mxu0 0.0
    %603 = vmatpush1.msra.mxu0 %v334
    %604 = vmatprep.subr.mxu0 0.0
    %605 = vmatpush1.msra.mxu0 %v337
    %606 = vmatprep.subr.mxu0 0.0
    %607 = vmatpush1.msra.mxu0 %v340
    %608 = vmatprep.subr.mxu0 0.0
    %609 = vmatpush1.msra.mxu0 %v343
    %610 = vmatprep.mubr.f32.mxu0 %v243
    %611 = vmatmul.mubr.f32.gmra.mrb[0].mxu0 %v242
    %v612 = vpop.f32.mrb[0].mxu0
    %v613 = vadd.f32 %v381, %v612
    %v614 = vpop.f32.mrb[0].mxu0
    %615 = vmatprep.mubr.f32.mxu0 %v246
    %616 = vmatmul.mubr.f32.gmra.mrb[0].mxu0 %v245
    %v617 = vpop.f32.mrb[0].mxu0
    %v618 = vadd.f32 %v381, %v617
    %v619 = vpop.f32.mrb[0].mxu0
    %620 = vdwg.mxu0
    %621 = vmatprep.subr.mxu0 0.0
    %622 = vmatpush1.msra.mxu0 %v346
    %623 = vmatprep.subr.mxu0 0.0
    %624 = vmatpush1.msra.mxu0 %v349
    %625 = vmatprep.subr.mxu0 0.0
    %626 = vmatpush1.msra.mxu0 %v352
    %627 = vmatprep.subr.mxu0 0.0
    %628 = vmatpush1.msra.mxu0 %v355
    %629 = vmatprep.subr.mxu0 0.0
    %630 = vmatpush1.msra.mxu0 %v358
    %631 = vmatprep.subr.mxu0 0.0
    %632 = vmatpush1.msra.mxu0 %v361
    %633 = vmatprep.subr.mxu0 0.0
    %634 = vmatpush1.msra.mxu0 %v364
    %635 = vmatprep.subr.mxu0 0.0
    %636 = vmatpush1.msra.mxu0 %v367
    %637 = vmatprep.subr.mxu0 0.0
    %638 = vmatpush1.msra.mxu0 0.0
    %639 = vmatprep.subr.mxu0 0.0
    %640 = vmatpush1.msra.mxu0 0.0
    %641 = vmatprep.subr.mxu0 0.0
    %642 = vmatpush1.msra.mxu0 0.0
    %643 = vmatprep.subr.mxu0 0.0
    %644 = vmatpush1.msra.mxu0 0.0
    %645 = vmatprep.subr.mxu0 0.0
    %646 = vmatpush1.msra.mxu0 0.0
    %647 = vmatprep.subr.mxu0 0.0
    %648 = vmatpush1.msra.mxu0 0.0
    %649 = vmatprep.subr.mxu0 0.0
    %650 = vmatpush1.msra.mxu0 0.0
    %651 = vmatprep.subr.mxu0 0.0
    %652 = vmatpush1.msra.mxu0 0.0
    %653 = vmatprep.subr.mxu0 0.0
    %654 = vmatpush1.msra.mxu0 0.0
    %655 = vmatprep.subr.mxu0 0.0
    %656 = vmatpush1.msra.mxu0 0.0
    %657 = vmatprep.subr.mxu0 0.0
    %658 = vmatpush1.msra.mxu0 0.0
    %659 = vmatprep.subr.mxu0 0.0
    %660 = vmatpush1.msra.mxu0 0.0
    %661 = vmatprep.subr.mxu0 0.0
    %662 = vmatpush1.msra.mxu0 0.0
    %663 = vmatprep.subr.mxu0 0.0
    %664 = vmatpush1.msra.mxu0 0.0
    %665 = vmatprep.subr.mxu0 0.0
    %666 = vmatpush1.msra.mxu0 0.0
    %667 = vmatprep.subr.mxu0 0.0
    %668 = vmatpush1.msra.mxu0 0.0
    %669 = vmatprep.subr.mxu0 0.0
    %670 = vmatpush1.msra.mxu0 0.0
    %671 = vmatprep.subr.mxu0 0.0
    %672 = vmatpush1.msra.mxu0 0.0
    %673 = vmatprep.subr.mxu0 0.0
    %674 = vmatpush1.msra.mxu0 0.0
    %675 = vmatprep.subr.mxu0 0.0
    %676 = vmatpush1.msra.mxu0 0.0
    %677 = vmatprep.subr.mxu0 0.0
    %678 = vmatpush1.msra.mxu0 0.0
    %679 = vmatprep.subr.mxu0 0.0
    %680 = vmatpush1.msra.mxu0 0.0
    %681 = vmatprep.subr.mxu0 0.0
    %682 = vmatpush1.msra.mxu0 0.0
    %683 = vmatprep.subr.mxu0 0.0
    %684 = vmatpush1.msra.mxu0 0.0
    %685 = vmatprep.mubr.f32.mxu0 0.0
    %686 = vmatmul.mubr.f32.gmra.mrb[0].mxu0 %v387
    %v687 = vpop.f32.mrb[0].mxu0
    %v688 = vadd.f32 %v613, %v687
    %v689 = vpop.f32.mrb[0].mxu0
    %690 = vmatprep.mubr.f32.mxu0 0.0
    %691 = vmatmul.mubr.f32.gmra.mrb[0].mxu0 %v390
    %v692 = vpop.f32.mrb[0].mxu0
    %v693 = vadd.f32 %v618, %v692
    %v694 = vpop.f32.mrb[0].mxu0
    %695 = vdwg.mxu0
    %v696 = vmax.f32 %v536, 0.0
    %v697 = vmax.f32 %v538, 0.0
    %v698 = vmax.f32 %v688, 0.0
    %v699 = vmax.f32 %v542, 0.0
    %v700 = vmax.f32 %v544, 0.0
    %v701 = vmax.f32 %v693, 0.0
    %v702 = vld [vmem:[#allocation5] sm:$0xff]
    %v703 = vld [vmem:[#allocation5 + $0x8] sm:$0xff]
    %v704 = vld [vmem:[#allocation5 + $0x10] sm:$0xff]
    %v705 = vld [vmem:[#allocation5 + $0x18] sm:$0xff]
    %v706 = vld [vmem:[#allocation5 + $0x20] sm:$0xff]
    %v707 = vld [vmem:[#allocation5 + $0x28] sm:$0xff]
    %v708 = vld [vmem:[#allocation5 + $0x30] sm:$0xff]
    %v709 = vld [vmem:[#allocation5 + $0x38] sm:$0xff]
    %v710 = vld [vmem:[#allocation5 + $0x40] sm:$0xff]
    %v711 = vld [vmem:[#allocation5 + $0x48] sm:$0xff]
    %v712 = vld [vmem:[#allocation5 + $0x50] sm:$0xff]
    %v713 = vld [vmem:[#allocation5 + $0x58] sm:$0xff]
    %v714 = vld [vmem:[#allocation5 + $0x60] sm:$0xff]
    %v715 = vld [vmem:[#allocation5 + $0x68] sm:$0xff]
    %v716 = vld [vmem:[#allocation5 + $0x70] sm:$0xff]
    %v717 = vld [vmem:[#allocation5 + $0x78] sm:$0xff]
    %v718 = vld [vmem:[#allocation5 + $0x80] sm:$0xff]
    %v719 = vld [vmem:[#allocation5 + $0x88] sm:$0xff]
    %v720 = vld [vmem:[#allocation5 + $0x90] sm:$0xff]
    %v721 = vld [vmem:[#allocation5 + $0x98] sm:$0xff]
    %v722 = vld [vmem:[#allocation5 + $0xa0] sm:$0xff]
    %v723 = vld [vmem:[#allocation5 + $0xa8] sm:$0xff]
    %v724 = vld [vmem:[#allocation5 + $0xb0] sm:$0xff]
    %v725 = vld [vmem:[#allocation5 + $0xb8] sm:$0xff]
    %v726 = vld [vmem:[#allocation5 + $0xc0] sm:$0xff]
    %v727 = vld [vmem:[#allocation5 + $0xc8] sm:$0xff]
    %v728 = vld [vmem:[#allocation5 + $0xd0] sm:$0xff]
    %v729 = vld [vmem:[#allocation5 + $0xd8] sm:$0xff]
    %v730 = vld [vmem:[#allocation5 + $0xe0] sm:$0xff]
    %v731 = vld [vmem:[#allocation5 + $0xe8] sm:$0xff]
    %v732 = vld [vmem:[#allocation5 + $0xf0] sm:$0xff]
    %v733 = vld [vmem:[#allocation5 + $0xf8] sm:$0xff]
    %v734 = vld [vmem:[#allocation5 + $0x100] sm:$0xff]
    %v735 = vld [vmem:[#allocation5 + $0x108] sm:$0xff]
    %v736 = vld [vmem:[#allocation5 + $0x110] sm:$0xff]
    %v737 = vld [vmem:[#allocation5 + $0x118] sm:$0xff]
    %v738 = vld [vmem:[#allocation5 + $0x120] sm:$0xff]
    %v739 = vld [vmem:[#allocation5 + $0x128] sm:$0xff]
    %v740 = vld [vmem:[#allocation5 + $0x130] sm:$0xff]
    %v741 = vld [vmem:[#allocation5 + $0x138] sm:$0xff]
    %v742 = vld [vmem:[#allocation5 + $0x140] sm:$0xff]
    %v743 = vld [vmem:[#allocation5 + $0x148] sm:$0xff]
    %v744 = vld [vmem:[#allocation5 + $0x150] sm:$0xff]
    %v745 = vld [vmem:[#allocation5 + $0x158] sm:$0xff]
    %v746 = vld [vmem:[#allocation5 + $0x160] sm:$0xff]
    %v747 = vld [vmem:[#allocation5 + $0x168] sm:$0xff]
    %v748 = vld [vmem:[#allocation5 + $0x170] sm:$0xff]
    %v749 = vld [vmem:[#allocation5 + $0x178] sm:$0xff]
    %v750 = vld [vmem:[#allocation5 + $0x180] sm:$0xff]
    %v751 = vld [vmem:[#allocation5 + $0x188] sm:$0xff]
    %v752 = vld [vmem:[#allocation5 + $0x190] sm:$0xff]
    %v753 = vld [vmem:[#allocation5 + $0x198] sm:$0xff]
    %v754 = vld [vmem:[#allocation5 + $0x1a0] sm:$0xff]
    %v755 = vld [vmem:[#allocation5 + $0x1a8] sm:$0xff]
    %v756 = vld [vmem:[#allocation5 + $0x1b0] sm:$0xff]
    %v757 = vld [vmem:[#allocation5 + $0x1b8] sm:$0xff]
    %v758 = vld [vmem:[#allocation5 + $0x1c0] sm:$0xff]
    %v759 = vld [vmem:[#allocation5 + $0x1c8] sm:$0xff]
    %v760 = vld [vmem:[#allocation5 + $0x1d0] sm:$0xff]
    %v761 = vld [vmem:[#allocation5 + $0x1d8] sm:$0xff]
    %v762 = vld [vmem:[#allocation5 + $0x1e0] sm:$0xff]
    %v763 = vld [vmem:[#allocation5 + $0x1e8] sm:$0xff]
    %v764 = vld [vmem:[#allocation5 + $0x1f0] sm:$0xff]
    %v765 = vld [vmem:[#allocation5 + $0x1f8] sm:$0xff]
    %v766 = vld [vmem:[#allocation5 + $0x200] sm:$0xff]
    %v767 = vld [vmem:[#allocation5 + $0x208] sm:$0xff]
    %v768 = vld [vmem:[#allocation5 + $0x210] sm:$0xff]
    %v769 = vld [vmem:[#allocation5 + $0x218] sm:$0xff]
    %v770 = vld [vmem:[#allocation5 + $0x220] sm:$0xff]
    %v771 = vld [vmem:[#allocation5 + $0x228] sm:$0xff]
    %v772 = vld [vmem:[#allocation5 + $0x230] sm:$0xff]
    %v773 = vld [vmem:[#allocation5 + $0x238] sm:$0xff]
    %v774 = vld [vmem:[#allocation5 + $0x240] sm:$0xff]
    %v775 = vld [vmem:[#allocation5 + $0x248] sm:$0xff]
    %v776 = vld [vmem:[#allocation5 + $0x250] sm:$0xff]
    %v777 = vld [vmem:[#allocation5 + $0x258] sm:$0xff]
    %v778 = vld [vmem:[#allocation5 + $0x260] sm:$0xff]
    %v779 = vld [vmem:[#allocation5 + $0x268] sm:$0xff]
    %v780 = vld [vmem:[#allocation5 + $0x270] sm:$0xff]
    %v781 = vld [vmem:[#allocation5 + $0x278] sm:$0xff]
    %v782 = vld [vmem:[#allocation5 + $0x280] sm:$0xff]
    %v783 = vld [vmem:[#allocation5 + $0x288] sm:$0xff]
    %v784 = vld [vmem:[#allocation5 + $0x290] sm:$0xff]
    %v785 = vld [vmem:[#allocation5 + $0x298] sm:$0xff]
    %v786 = vld [vmem:[#allocation5 + $0x2a0] sm:$0xff]
    %v787 = vld [vmem:[#allocation5 + $0x2a8] sm:$0xff]
    %v788 = vld [vmem:[#allocation5 + $0x2b0] sm:$0xff]
    %v789 = vld [vmem:[#allocation5 + $0x2b8] sm:$0xff]
    %v790 = vld [vmem:[#allocation5 + $0x2c0] sm:$0xff]
    %v791 = vld [vmem:[#allocation5 + $0x2c8] sm:$0xff]
    %v792 = vld [vmem:[#allocation5 + $0x2d0] sm:$0xff]
    %v793 = vld [vmem:[#allocation5 + $0x2d8] sm:$0xff]
    %v794 = vld [vmem:[#allocation5 + $0x2e0] sm:$0xff]
    %v795 = vld [vmem:[#allocation5 + $0x2e8] sm:$0xff]
    %v796 = vld [vmem:[#allocation5 + $0x2f0] sm:$0xff]
    %v797 = vld [vmem:[#allocation5 + $0x2f8] sm:$0xff]
    %v798 = vld [vmem:[#allocation5 + $0x300] sm:$0xff]
    %v799 = vld [vmem:[#allocation5 + $0x308] sm:$0xff]
    %v800 = vld [vmem:[#allocation5 + $0x310] sm:$0xff]
    %v801 = vld [vmem:[#allocation5 + $0x318] sm:$0xff]
    %v802 = vld [vmem:[#allocation5 + $0x320] sm:$0xff]
    %v803 = vld [vmem:[#allocation5 + $0x328] sm:$0xff]
    %v804 = vld [vmem:[#allocation5 + $0x330] sm:$0xff]
    %v805 = vld [vmem:[#allocation5 + $0x338] sm:$0xff]
    %v806 = vld [vmem:[#allocation5 + $0x340] sm:$0xff]
    %v807 = vld [vmem:[#allocation5 + $0x348] sm:$0xff]
    %v808 = vld [vmem:[#allocation5 + $0x350] sm:$0xff]
    %v809 = vld [vmem:[#allocation5 + $0x358] sm:$0xff]
    %v810 = vld [vmem:[#allocation5 + $0x360] sm:$0xff]
    %v811 = vld [vmem:[#allocation5 + $0x368] sm:$0xff]
    %v812 = vld [vmem:[#allocation5 + $0x370] sm:$0xff]
    %v813 = vld [vmem:[#allocation5 + $0x378] sm:$0xff]
    %v814 = vld [vmem:[#allocation5 + $0x380] sm:$0xff]
    %v815 = vld [vmem:[#allocation5 + $0x388] sm:$0xff]
    %v816 = vld [vmem:[#allocation5 + $0x390] sm:$0xff]
    %v817 = vld [vmem:[#allocation5 + $0x398] sm:$0xff]
    %v818 = vld [vmem:[#allocation5 + $0x3a0] sm:$0xff]
    %v819 = vld [vmem:[#allocation5 + $0x3a8] sm:$0xff]
    %v820 = vld [vmem:[#allocation5 + $0x3b0] sm:$0xff]
    %v821 = vld [vmem:[#allocation5 + $0x3b8] sm:$0xff]
    %v822 = vld [vmem:[%s6] sm:$0x7]
    %v824 = vlaneseq
    %v825 = vshrl.u32 %v824, 7
    %v826 = vsub.s32 0, %v825
    %v827 = vrot.slane %v822, %v826
    %v828 = vlaneseq
    %v829 = vshrl.u32 %v828, 7
    %v830 = vsub.s32 1, %v829
    %v831 = vrot.slane %v822, %v830
    %v832 = vlaneseq
    %v833 = vshrl.u32 %v832, 7
    %v834 = vsub.s32 2, %v833
    %v835 = vrot.slane %v822, %v834
    %v840 = vsel %vm385, %v698, 0
    %v843 = vsel %vm385, %v701, 0
    %845 = vmatprep.subr.mxu0 %v703
    %846 = vmatpush1.msra.mxu0 %v702
    %847 = vmatprep.subr.mxu0 %v706
    %848 = vmatpush1.msra.mxu0 %v705
    %849 = vmatprep.subr.mxu0 %v709
    %850 = vmatpush1.msra.mxu0 %v708
    %851 = vmatprep.subr.mxu0 %v712
    %852 = vmatpush1.msra.mxu0 %v711
    %853 = vmatprep.subr.mxu0 %v715
    %854 = vmatpush1.msra.mxu0 %v714
    %855 = vmatprep.subr.mxu0 %v718
    %856 = vmatpush1.msra.mxu0 %v717
    %857 = vmatprep.subr.mxu0 %v721
    %858 = vmatpush1.msra.mxu0 %v720
    %859 = vmatprep.subr.mxu0 %v724
    %860 = vmatpush1.msra.mxu0 %v723
    %861 = vmatprep.subr.mxu0 %v727
    %862 = vmatpush1.msra.mxu0 %v726
    %863 = vmatprep.subr.mxu0 %v730
    %864 = vmatpush1.msra.mxu0 %v729
    %865 = vmatprep.subr.mxu0 %v733
    %866 = vmatpush1.msra.mxu0 %v732
    %867 = vmatprep.subr.mxu0 %v736
    %868 = vmatpush1.msra.mxu0 %v735
    %869 = vmatprep.subr.mxu0 %v739
    %870 = vmatpush1.msra.mxu0 %v738
    %871 = vmatprep.subr.mxu0 %v742
    %872 = vmatpush1.msra.mxu0 %v741
    %873 = vmatprep.subr.mxu0 %v745
    %874 = vmatpush1.msra.mxu0 %v744
    %875 = vmatprep.subr.mxu0 %v748
    %876 = vmatpush1.msra.mxu0 %v747
    %877 = vmatprep.subr.mxu0 %v751
    %878 = vmatpush1.msra.mxu0 %v750
    %879 = vmatprep.subr.mxu0 %v754
    %880 = vmatpush1.msra.mxu0 %v753
    %881 = vmatprep.subr.mxu0 %v757
    %882 = vmatpush1.msra.mxu0 %v756
    %883 = vmatprep.subr.mxu0 %v760
    %884 = vmatpush1.msra.mxu0 %v759
    %885 = vmatprep.subr.mxu0 %v763
    %886 = vmatpush1.msra.mxu0 %v762
    %887 = vmatprep.subr.mxu0 %v766
    %888 = vmatpush1.msra.mxu0 %v765
    %889 = vmatprep.subr.mxu0 %v769
    %890 = vmatpush1.msra.mxu0 %v768
    %891 = vmatprep.subr.mxu0 %v772
    %892 = vmatpush1.msra.mxu0 %v771
    %893 = vmatprep.subr.mxu0 %v775
    %894 = vmatpush1.msra.mxu0 %v774
    %895 = vmatprep.subr.mxu0 %v778
    %896 = vmatpush1.msra.mxu0 %v777
    %897 = vmatprep.subr.mxu0 %v781
    %898 = vmatpush1.msra.mxu0 %v780
    %899 = vmatprep.subr.mxu0 %v784
    %900 = vmatpush1.msra.mxu0 %v783
    %901 = vmatprep.subr.mxu0 %v787
    %902 = vmatpush1.msra.mxu0 %v786
    %903 = vmatprep.subr.mxu0 %v790
    %904 = vmatpush1.msra.mxu0 %v789
    %905 = vmatprep.subr.mxu0 %v793
    %906 = vmatpush1.msra.mxu0 %v792
    %907 = vmatprep.subr.mxu0 %v796
    %908 = vmatpush1.msra.mxu0 %v795
    %909 = vmatprep.mubr.f32.mxu0 %v697
    %910 = vmatmul.mubr.f32.gmra.mrb[0].mxu0 %v696
    %v911 = vpop.f32.mrb[0].mxu0
    %v912 = vadd.f32 %v827, %v911
    %v913 = vpop.f32.mrb[0].mxu0
    %v914 = vadd.f32 %v831, %v913
    %915 = vmatprep.mubr.f32.mxu0 %v700
    %916 = vmatmul.mubr.f32.gmra.mrb[0].mxu0 %v699
    %v917 = vpop.f32.mrb[0].mxu0
    %v918 = vadd.f32 %v827, %v917
    %v919 = vpop.f32.mrb[0].mxu0
    %v920 = vadd.f32 %v831, %v919
    %921 = vdwg.mxu0
    %922 = vmatprep.subr.mxu0 %v799
    %923 = vmatpush1.msra.mxu0 %v798
    %924 = vmatprep.subr.mxu0 %v802
    %925 = vmatpush1.msra.mxu0 %v801
    %926 = vmatprep.subr.mxu0 %v805
    %927 = vmatpush1.msra.mxu0 %v804
    %928 = vmatprep.subr.mxu0 %v808
    %929 = vmatpush1.msra.mxu0 %v807
    %930 = vmatprep.subr.mxu0 %v811
    %931 = vmatpush1.msra.mxu0 %v810
    %932 = vmatprep.subr.mxu0 %v814
    %933 = vmatpush1.msra.mxu0 %v813
    %934 = vmatprep.subr.mxu0 %v817
    %935 = vmatpush1.msra.mxu0 %v816
    %936 = vmatprep.subr.mxu0 %v820
    %937 = vmatpush1.msra.mxu0 %v819
    %938 = vmatprep.subr.mxu0 0.0
    %939 = vmatpush1.msra.mxu0 0.0
    %940 = vmatprep.subr.mxu0 0.0
    %941 = vmatpush1.msra.mxu0 0.0
    %942 = vmatprep.subr.mxu0 0.0
    %943 = vmatpush1.msra.mxu0 0.0
    %944 = vmatprep.subr.mxu0 0.0
    %945 = vmatpush1.msra.mxu0 0.0
    %946 = vmatprep.subr.mxu0 0.0
    %947 = vmatpush1.msra.mxu0 0.0
    %948 = vmatprep.subr.mxu0 0.0
    %949 = vmatpush1.msra.mxu0 0.0
    %950 = vmatprep.subr.mxu0 0.0
    %951 = vmatpush1.msra.mxu0 0.0
    %952 = vmatprep.subr.mxu0 0.0
    %953 = vmatpush1.msra.mxu0 0.0
    %954 = vmatprep.subr.mxu0 0.0
    %955 = vmatpush1.msra.mxu0 0.0
    %956 = vmatprep.subr.mxu0 0.0
    %957 = vmatpush1.msra.mxu0 0.0
    %958 = vmatprep.subr.mxu0 0.0
    %959 = vmatpush1.msra.mxu0 0.0
    %960 = vmatprep.subr.mxu0 0.0
    %961 = vmatpush1.msra.mxu0 0.0
    %962 = vmatprep.subr.mxu0 0.0
    %963 = vmatpush1.msra.mxu0 0.0
    %964 = vmatprep.subr.mxu0 0.0
    %965 = vmatpush1.msra.mxu0 0.0
    %966 = vmatprep.subr.mxu0 0.0
    %967 = vmatpush1.msra.mxu0 0.0
    %968 = vmatprep.subr.mxu0 0.0
    %969 = vmatpush1.msra.mxu0 0.0
    %970 = vmatprep.subr.mxu0 0.0
    %971 = vmatpush1.msra.mxu0 0.0
    %972 = vmatprep.subr.mxu0 0.0
    %973 = vmatpush1.msra.mxu0 0.0
    %974 = vmatprep.subr.mxu0 0.0
    %975 = vmatpush1.msra.mxu0 0.0
    %976 = vmatprep.subr.mxu0 0.0
    %977 = vmatpush1.msra.mxu0 0.0
    %978 = vmatprep.subr.mxu0 0.0
    %979 = vmatpush1.msra.mxu0 0.0
    %980 = vmatprep.subr.mxu0 0.0
    %981 = vmatpush1.msra.mxu0 0.0
    %982 = vmatprep.subr.mxu0 0.0
    %983 = vmatpush1.msra.mxu0 0.0
    %984 = vmatprep.subr.mxu0 0.0
    %985 = vmatpush1.msra.mxu0 0.0
    %986 = vmatprep.mubr.f32.mxu0 0.0
    %987 = vmatmul.mubr.f32.gmra.mrb[0].mxu0 %v840
    %v988 = vpop.f32.mrb[0].mxu0
    %v989 = vadd.f32 %v912, %v988
    %v990 = vpop.f32.mrb[0].mxu0
    %v991 = vadd.f32 %v914, %v990
    %992 = vmatprep.mubr.f32.mxu0 0.0
    %993 = vmatmul.mubr.f32.gmra.mrb[0].mxu0 %v843
    %v994 = vpop.f32.mrb[0].mxu0
    %v995 = vadd.f32 %v918, %v994
    %v996 = vpop.f32.mrb[0].mxu0
    %v997 = vadd.f32 %v920, %v996
    %998 = vdwg.mxu0
    %999 = vmatprep.subr.mxu0 0.0
    %1000 = vmatpush1.msra.mxu0 %v704
    %1001 = vmatprep.subr.mxu0 0.0
    %1002 = vmatpush1.msra.mxu0 %v707
    %1003 = vmatprep.subr.mxu0 0.0
    %1004 = vmatpush1.msra.mxu0 %v710
    %1005 = vmatprep.subr.mxu0 0.0
    %1006 = vmatpush1.msra.mxu0 %v713
    %1007 = vmatprep.subr.mxu0 0.0
    %1008 = vmatpush1.msra.mxu0 %v716
    %1009 = vmatprep.subr.mxu0 0.0
    %1010 = vmatpush1.msra.mxu0 %v719
    %1011 = vmatprep.subr.mxu0 0.0
    %1012 = vmatpush1.msra.mxu0 %v722
    %1013 = vmatprep.subr.mxu0 0.0
    %1014 = vmatpush1.msra.mxu0 %v725
    %1015 = vmatprep.subr.mxu0 0.0
    %1016 = vmatpush1.msra.mxu0 %v728
    %1017 = vmatprep.subr.mxu0 0.0
    %1018 = vmatpush1.msra.mxu0 %v731
    %1019 = vmatprep.subr.mxu0 0.0
    %1020 = vmatpush1.msra.mxu0 %v734
    %1021 = vmatprep.subr.mxu0 0.0
    %1022 = vmatpush1.msra.mxu0 %v737
    %1023 = vmatprep.subr.mxu0 0.0
    %1024 = vmatpush1.msra.mxu0 %v740
    %1025 = vmatprep.subr.mxu0 0.0
    %1026 = vmatpush1.msra.mxu0 %v743
    %1027 = vmatprep.subr.mxu0 0.0
    %1028 = vmatpush1.msra.mxu0 %v746
    %1029 = vmatprep.subr.mxu0 0.0
    %1030 = vmatpush1.msra.mxu0 %v749
    %1031 = vmatprep.subr.mxu0 0.0
    %1032 = vmatpush1.msra.mxu0 %v752
    %1033 = vmatprep.subr.mxu0 0.0
    %1034 = vmatpush1.msra.mxu0 %v755
    %1035 = vmatprep.subr.mxu0 0.0
    %1036 = vmatpush1.msra.mxu0 %v758
    %1037 = vmatprep.subr.mxu0 0.0
    %1038 = vmatpush1.msra.mxu0 %v761
    %1039 = vmatprep.subr.mxu0 0.0
    %1040 = vmatpush1.msra.mxu0 %v764
    %1041 = vmatprep.subr.mxu0 0.0
    %1042 = vmatpush1.msra.mxu0 %v767
    %1043 = vmatprep.subr.mxu0 0.0
    %1044 = vmatpush1.msra.mxu0 %v770
    %1045 = vmatprep.subr.mxu0 0.0
    %1046 = vmatpush1.msra.mxu0 %v773
    %1047 = vmatprep.subr.mxu0 0.0
    %1048 = vmatpush1.msra.mxu0 %v776
    %1049 = vmatprep.subr.mxu0 0.0
    %1050 = vmatpush1.msra.mxu0 %v779
    %1051 = vmatprep.subr.mxu0 0.0
    %1052 = vmatpush1.msra.mxu0 %v782
    %1053 = vmatprep.subr.mxu0 0.0
    %1054 = vmatpush1.msra.mxu0 %v785
    %1055 = vmatprep.subr.mxu0 0.0
    %1056 = vmatpush1.msra.mxu0 %v788
    %1057 = vmatprep.subr.mxu0 0.0
    %1058 = vmatpush1.msra.mxu0 %v791
    %1059 = vmatprep.subr.mxu0 0.0
    %1060 = vmatpush1.msra.mxu0 %v794
    %1061 = vmatprep.subr.mxu0 0.0
    %1062 = vmatpush1.msra.mxu0 %v797
    %1063 = vmatprep.mubr.f32.mxu0 %v697
    %1064 = vmatmul.mubr.f32.gmra.mrb[0].mxu0 %v696
    %v1065 = vpop.f32.mrb[0].mxu0
    %v1066 = vadd.f32 %v835, %v1065
    %v1067 = vpop.f32.mrb[0].mxu0
    %1068 = vmatprep.mubr.f32.mxu0 %v700
    %1069 = vmatmul.mubr.f32.gmra.mrb[0].mxu0 %v699
    %v1070 = vpop.f32.mrb[0].mxu0
    %v1071 = vadd.f32 %v835, %v1070
    %v1072 = vpop.f32.mrb[0].mxu0
    %1073 = vdwg.mxu0
    %1074 = vmatprep.subr.mxu0 0.0
    %1075 = vmatpush1.msra.mxu0 %v800
    %1076 = vmatprep.subr.mxu0 0.0
    %1077 = vmatpush1.msra.mxu0 %v803
    %1078 = vmatprep.subr.mxu0 0.0
    %1079 = vmatpush1.msra.mxu0 %v806
    %1080 = vmatprep.subr.mxu0 0.0
    %1081 = vmatpush1.msra.mxu0 %v809
    %1082 = vmatprep.subr.mxu0 0.0
    %1083 = vmatpush1.msra.mxu0 %v812
    %1084 = vmatprep.subr.mxu0 0.0
    %1085 = vmatpush1.msra.mxu0 %v815
    %1086 = vmatprep.subr.mxu0 0.0
    %1087 = vmatpush1.msra.mxu0 %v818
    %1088 = vmatprep.subr.mxu0 0.0
    %1089 = vmatpush1.msra.mxu0 %v821
    %1090 = vmatprep.subr.mxu0 0.0
    %1091 = vmatpush1.msra.mxu0 0.0
    %1092 = vmatprep.subr.mxu0 0.0
    %1093 = vmatpush1.msra.mxu0 0.0
    %1094 = vmatprep.subr.mxu0 0.0
    %1095 = vmatpush1.msra.mxu0 0.0
    %1096 = vmatprep.subr.mxu0 0.0
    %1097 = vmatpush1.msra.mxu0 0.0
    %1098 = vmatprep.subr.mxu0 0.0
    %1099 = vmatpush1.msra.mxu0 0.0
    %1100 = vmatprep.subr.mxu0 0.0
    %1101 = vmatpush1.msra.mxu0 0.0
    %1102 = vmatprep.subr.mxu0 0.0
    %1103 = vmatpush1.msra.mxu0 0.0
    %1104 = vmatprep.subr.mxu0 0.0
    %1105 = vmatpush1.msra.mxu0 0.0
    %1106 = vmatprep.subr.mxu0 0.0
    %1107 = vmatpush1.msra.mxu0 0.0
    %1108 = vmatprep.subr.mxu0 0.0
    %1109 = vmatpush1.msra.mxu0 0.0
    %1110 = vmatprep.subr.mxu0 0.0
    %1111 = vmatpush1.msra.mxu0 0.0
    %1112 = vmatprep.subr.mxu0 0.0
    %1113 = vmatpush1.msra.mxu0 0.0
    %1114 = vmatprep.subr.mxu0 0.0
    %1115 = vmatpush1.msra.mxu0 0.0
    %1116 = vmatprep.subr.mxu0 0.0
    %1117 = vmatpush1.msra.mxu0 0.0
    %1118 = vmatprep.subr.mxu0 0.0
    %1119 = vmatpush1.msra.mxu0 0.0
    %1120 = vmatprep.subr.mxu0 0.0
    %1121 = vmatpush1.msra.mxu0 0.0
    %1122 = vmatprep.subr.mxu0 0.0
    %1123 = vmatpush1.msra.mxu0 0.0
    %1124 = vmatprep.subr.mxu0 0.0
    %1125 = vmatpush1.msra.mxu0 0.0
    %1126 = vmatprep.subr.mxu0 0.0
    %1127 = vmatpush1.msra.mxu0 0.0
    %1128 = vmatprep.subr.mxu0 0.0
    %1129 = vmatpush1.msra.mxu0 0.0
    %1130 = vmatprep.subr.mxu0 0.0
    %1131 = vmatpush1.msra.mxu0 0.0
    %1132 = vmatprep.subr.mxu0 0.0
    %1133 = vmatpush1.msra.mxu0 0.0
    %1134 = vmatprep.subr.mxu0 0.0
    %1135 = vmatpush1.msra.mxu0 0.0
    %1136 = vmatprep.subr.mxu0 0.0
    %1137 = vmatpush1.msra.mxu0 0.0
    %1138 = vmatprep.mubr.f32.mxu0 0.0
    %1139 = vmatmul.mubr.f32.gmra.mrb[0].mxu0 %v840
    %v1140 = vpop.f32.mrb[0].mxu0
    %v1141 = vadd.f32 %v1066, %v1140
    %v1142 = vpop.f32.mrb[0].mxu0
    %1143 = vmatprep.mubr.f32.mxu0 0.0
    %1144 = vmatmul.mubr.f32.gmra.mrb[0].mxu0 %v843
    %v1145 = vpop.f32.mrb[0].mxu0
    %v1146 = vadd.f32 %v1071, %v1145
    %v1147 = vpop.f32.mrb[0].mxu0
    %1148 = vdwg.mxu0
    %v1149 = vmax.f32 %v989, 0.0
    %v1150 = vmax.f32 %v991, 0.0
    %v1151 = vmax.f32 %v1141, 0.0
    %v1152 = vmax.f32 %v995, 0.0
    %v1153 = vmax.f32 %v997, 0.0
    %v1154 = vmax.f32 %v1146, 0.0
    %v1155 = vld [vmem:[%s7] sm:$0xff]
    %v1156 = vld [vmem:[%s7 + $0x8] sm:$0xff]
    %v1157 = vld [vmem:[%s7 + $0x10] sm:$0xff]
    %v1158 = vld [vmem:[%s7 + $0x18] sm:$0xff]
    %v1159 = vld [vmem:[%s7 + $0x20] sm:$0xff]
    %v1160 = vld [vmem:[%s7 + $0x28] sm:$0xff]
    %v1161 = vld [vmem:[%s7 + $0x30] sm:$0xff]
    %v1162 = vld [vmem:[%s7 + $0x38] sm:$0xff]
    %v1163 = vld [vmem:[%s7 + $0x40] sm:$0xff]
    %v1164 = vld [vmem:[%s7 + $0x48] sm:$0xff]
    %v1165 = vld [vmem:[%s7 + $0x50] sm:$0xff]
    %v1166 = vld [vmem:[%s7 + $0x58] sm:$0xff]
    %v1167 = vld [vmem:[%s7 + $0x60] sm:$0xff]
    %v1168 = vld [vmem:[%s7 + $0x68] sm:$0xff]
    %v1169 = vld [vmem:[%s7 + $0x70] sm:$0xff]
    %v1170 = vld [vmem:[%s7 + $0x78] sm:$0xff]
    %v1171 = vld [vmem:[%s7 + $0x80] sm:$0xff]
    %v1172 = vld [vmem:[%s7 + $0x88] sm:$0xff]
    %v1173 = vld [vmem:[%s7 + $0x90] sm:$0xff]
    %v1174 = vld [vmem:[%s7 + $0x98] sm:$0xff]
    %v1175 = vld [vmem:[%s7 + $0xa0] sm:$0xff]
    %v1176 = vld [vmem:[%s7 + $0xa8] sm:$0xff]
    %v1177 = vld [vmem:[%s7 + $0xb0] sm:$0xff]
    %v1178 = vld [vmem:[%s7 + $0xb8] sm:$0xff]
    %v1179 = vld [vmem:[%s7 + $0xc0] sm:$0xff]
    %v1180 = vld [vmem:[%s7 + $0xc8] sm:$0xff]
    %v1181 = vld [vmem:[%s7 + $0xd0] sm:$0xff]
    %v1182 = vld [vmem:[%s7 + $0xd8] sm:$0xff]
    %v1183 = vld [vmem:[%s7 + $0xe0] sm:$0xff]
    %v1184 = vld [vmem:[%s7 + $0xe8] sm:$0xff]
    %v1185 = vld [vmem:[%s7 + $0xf0] sm:$0xff]
    %v1186 = vld [vmem:[%s7 + $0xf8] sm:$0xff]
    %v1187 = vld [vmem:[%s7 + $0x100] sm:$0xff]
    %v1188 = vld [vmem:[%s7 + $0x108] sm:$0xff]
    %v1189 = vld [vmem:[%s7 + $0x110] sm:$0xff]
    %v1190 = vld [vmem:[%s7 + $0x118] sm:$0xff]
    %v1191 = vld [vmem:[%s7 + $0x120] sm:$0xff]
    %v1192 = vld [vmem:[%s7 + $0x128] sm:$0xff]
    %v1193 = vld [vmem:[%s7 + $0x130] sm:$0xff]
    %v1194 = vld [vmem:[%s7 + $0x138] sm:$0xff]
    %v1195 = vld [vmem:[%s8] sm:$0x1]
    %v1197 = vlaneseq
    %v1198 = vshrl.u32 %v1197, 7
    %v1199 = vsub.s32 0, %v1198
    %v1200 = vrot.slane %v1195, %v1199
    %v1203 = vsel %vm385, %v1151, 0
    %v1206 = vsel %vm385, %v1154, 0
    %1208 = vmatprep.subr.mxu0 0.0
    %1209 = vmatpush1.msra.mxu0 %v1155
    %1210 = vmatprep.subr.mxu0 0.0
    %1211 = vmatpush1.msra.mxu0 %v1156
    %1212 = vmatprep.subr.mxu0 0.0
    %1213 = vmatpush1.msra.mxu0 %v1157
    %1214 = vmatprep.subr.mxu0 0.0
    %1215 = vmatpush1.msra.mxu0 %v1158
    %1216 = vmatprep.subr.mxu0 0.0
    %1217 = vmatpush1.msra.mxu0 %v1159
    %1218 = vmatprep.subr.mxu0 0.0
    %1219 = vmatpush1.msra.mxu0 %v1160
    %1220 = vmatprep.subr.mxu0 0.0
    %1221 = vmatpush1.msra.mxu0 %v1161
    %1222 = vmatprep.subr.mxu0 0.0
    %1223 = vmatpush1.msra.mxu0 %v1162
    %1224 = vmatprep.subr.mxu0 0.0
    %1225 = vmatpush1.msra.mxu0 %v1163
    %1226 = vmatprep.subr.mxu0 0.0
    %1227 = vmatpush1.msra.mxu0 %v1164
    %1228 = vmatprep.subr.mxu0 0.0
    %1229 = vmatpush1.msra.mxu0 %v1165
    %1230 = vmatprep.subr.mxu0 0.0
    %1231 = vmatpush1.msra.mxu0 %v1166
    %1232 = vmatprep.subr.mxu0 0.0
    %1233 = vmatpush1.msra.mxu0 %v1167
    %1234 = vmatprep.subr.mxu0 0.0
    %1235 = vmatpush1.msra.mxu0 %v1168
    %1236 = vmatprep.subr.mxu0 0.0
    %1237 = vmatpush1.msra.mxu0 %v1169
    %1238 = vmatprep.subr.mxu0 0.0
    %1239 = vmatpush1.msra.mxu0 %v1170
    %1240 = vmatprep.subr.mxu0 0.0
    %1241 = vmatpush1.msra.mxu0 %v1171
    %1242 = vmatprep.subr.mxu0 0.0
    %1243 = vmatpush1.msra.mxu0 %v1172
    %1244 = vmatprep.subr.mxu0 0.0
    %1245 = vmatpush1.msra.mxu0 %v1173
    %1246 = vmatprep.subr.mxu0 0.0
    %1247 = vmatpush1.msra.mxu0 %v1174
    %1248 = vmatprep.subr.mxu0 0.0
    %1249 = vmatpush1.msra.mxu0 %v1175
    %1250 = vmatprep.subr.mxu0 0.0
    %1251 = vmatpush1.msra.mxu0 %v1176
    %1252 = vmatprep.subr.mxu0 0.0
    %1253 = vmatpush1.msra.mxu0 %v1177
    %1254 = vmatprep.subr.mxu0 0.0
    %1255 = vmatpush1.msra.mxu0 %v1178
    %1256 = vmatprep.subr.mxu0 0.0
    %1257 = vmatpush1.msra.mxu0 %v1179
    %1258 = vmatprep.subr.mxu0 0.0
    %1259 = vmatpush1.msra.mxu0 %v1180
    %1260 = vmatprep.subr.mxu0 0.0
    %1261 = vmatpush1.msra.mxu0 %v1181
    %1262 = vmatprep.subr.mxu0 0.0
    %1263 = vmatpush1.msra.mxu0 %v1182
    %1264 = vmatprep.subr.mxu0 0.0
    %1265 = vmatpush1.msra.mxu0 %v1183
    %1266 = vmatprep.subr.mxu0 0.0
    %1267 = vmatpush1.msra.mxu0 %v1184
    %1268 = vmatprep.subr.mxu0 0.0
    %1269 = vmatpush1.msra.mxu0 %v1185
    %1270 = vmatprep.subr.mxu0 0.0
    %1271 = vmatpush1.msra.mxu0 %v1186
    %1272 = vmatprep.mubr.f32.mxu0 %v1150
    %1273 = vmatmul.mubr.f32.gmra.mrb[0].mxu0 %v1149
    %v1274 = vpop.f32.mrb[0].mxu0
    %v1275 = vadd.f32 %v1200, %v1274
    %v1276 = vpop.f32.mrb[0].mxu0
    %1277 = vmatprep.mubr.f32.mxu0 %v1153
    %1278 = vmatmul.mubr.f32.gmra.mrb[0].mxu0 %v1152
    %v1279 = vpop.f32.mrb[0].mxu0
    %v1280 = vadd.f32 %v1200, %v1279
    %v1281 = vpop.f32.mrb[0].mxu0
    %1282 = vdwg.mxu0
    %1283 = vmatprep.subr.mxu0 0.0
    %1284 = vmatpush1.msra.mxu0 %v1187
    %1285 = vmatprep.subr.mxu0 0.0
    %1286 = vmatpush1.msra.mxu0 %v1188
    %1287 = vmatprep.subr.mxu0 0.0
    %1288 = vmatpush1.msra.mxu0 %v1189
    %1289 = vmatprep.subr.mxu0 0.0
    %1290 = vmatpush1.msra.mxu0 %v1190
    %1291 = vmatprep.subr.mxu0 0.0
    %1292 = vmatpush1.msra.mxu0 %v1191
    %1293 = vmatprep.subr.mxu0 0.0
    %1294 = vmatpush1.msra.mxu0 %v1192
    %1295 = vmatprep.subr.mxu0 0.0
    %1296 = vmatpush1.msra.mxu0 %v1193
    %1297 = vmatprep.subr.mxu0 0.0
    %1298 = vmatpush1.msra.mxu0 %v1194
    %1299 = vmatprep.subr.mxu0 0.0
    %1300 = vmatpush1.msra.mxu0 0.0
    %1301 = vmatprep.subr.mxu0 0.0
    %1302 = vmatpush1.msra.mxu0 0.0
    %1303 = vmatprep.subr.mxu0 0.0
    %1304 = vmatpush1.msra.mxu0 0.0
    %1305 = vmatprep.subr.mxu0 0.0
    %1306 = vmatpush1.msra.mxu0 0.0
    %1307 = vmatprep.subr.mxu0 0.0
    %1308 = vmatpush1.msra.mxu0 0.0
    %1309 = vmatprep.subr.mxu0 0.0
    %1310 = vmatpush1.msra.mxu0 0.0
    %1311 = vmatprep.subr.mxu0 0.0
    %1312 = vmatpush1.msra.mxu0 0.0
    %1313 = vmatprep.subr.mxu0 0.0
    %1314 = vmatpush1.msra.mxu0 0.0
    %1315 = vmatprep.subr.mxu0 0.0
    %1316 = vmatpush1.msra.mxu0 0.0
    %1317 = vmatprep.subr.mxu0 0.0
    %1318 = vmatpush1.msra.mxu0 0.0
    %1319 = vmatprep.subr.mxu0 0.0
    %1320 = vmatpush1.msra.mxu0 0.0
    %1321 = vmatprep.subr.mxu0 0.0
    %1322 = vmatpush1.msra.mxu0 0.0
    %1323 = vmatprep.subr.mxu0 0.0
    %1324 = vmatpush1.msra.mxu0 0.0
    %1325 = vmatprep.subr.mxu0 0.0
    %1326 = vmatpush1.msra.mxu0 0.0
    %1327 = vmatprep.subr.mxu0 0.0
    %1328 = vmatpush1.msra.mxu0 0.0
    %1329 = vmatprep.subr.mxu0 0.0
    %1330 = vmatpush1.msra.mxu0 0.0
    %1331 = vmatprep.subr.mxu0 0.0
    %1332 = vmatpush1.msra.mxu0 0.0
    %1333 = vmatprep.subr.mxu0 0.0
    %1334 = vmatpush1.msra.mxu0 0.0
    %1335 = vmatprep.subr.mxu0 0.0
    %1336 = vmatpush1.msra.mxu0 0.0
    %1337 = vmatprep.subr.mxu0 0.0
    %1338 = vmatpush1.msra.mxu0 0.0
    %1339 = vmatprep.subr.mxu0 0.0
    %1340 = vmatpush1.msra.mxu0 0.0
    %1341 = vmatprep.subr.mxu0 0.0
    %1342 = vmatpush1.msra.mxu0 0.0
    %1343 = vmatprep.subr.mxu0 0.0
    %1344 = vmatpush1.msra.mxu0 0.0
    %1345 = vmatprep.subr.mxu0 0.0
    %1346 = vmatpush1.msra.mxu0 0.0
    %1347 = vmatprep.mubr.f32.mxu0 0.0
    %1348 = vmatmul.mubr.f32.gmra.mrb[0].mxu0 %v1203
    %v1349 = vpop.f32.mrb[0].mxu0
    %v1350 = vadd.f32 %v1275, %v1349
    %v1351 = vpop.f32.mrb[0].mxu0
    %1352 = vmatprep.mubr.f32.mxu0 0.0
    %1353 = vmatmul.mubr.f32.gmra.mrb[0].mxu0 %v1206
    %v1354 = vpop.f32.mrb[0].mxu0
    %v1355 = vadd.f32 %v1280, %v1354
    %v1356 = vpop.f32.mrb[0].mxu0
    %1357 = vdwg.mxu0
    %v1358 = vlaneseq
    %v1359 = vshrl.u32 %v1358, 7
    %v1360 = vadd.s32 %v1359, 8
    %v1361 = vadd.s32 %v1359, 16
    %v1362 = vadd.s32 %v1359, 24
    %v1363 = vadd.s32 %v1359, 32
    %v1364 = vlaneseq
    %v1365 = vand.u32 %v1364, 127
    %vm1366 = vcmp.lt.s32.totalorder %v1359, 0
    %v1367 = vsub.s32 0, %v1359
    %v1368 = vsel %vm1366, %v1367, %v1359
    %v1369 = vshrl.u32 %v1368, 2
    %v1370 = vand.u32 %v1368, 3
    %v1371 = vsub.s32 0, %v1370
    %v1372 = vsel %vm1366, %v1371, %v1370
    %vm1373 = vcmp.lt.s32.totalorder %v1360, 0
    %v1374 = vsub.s32 0, %v1360
    %v1375 = vsel %vm1373, %v1374, %v1360
    %v1376 = vshrl.u32 %v1375, 2
    %v1377 = vand.u32 %v1375, 3
    %v1378 = vsub.s32 0, %v1377
    %v1379 = vsel %vm1373, %v1378, %v1377
    %vm1380 = vcmp.lt.s32.totalorder %v1361, 0
    %v1381 = vsub.s32 0, %v1361
    %v1382 = vsel %vm1380, %v1381, %v1361
    %v1383 = vshrl.u32 %v1382, 2
    %v1384 = vand.u32 %v1382, 3
    %v1385 = vsub.s32 0, %v1384
    %v1386 = vsel %vm1380, %v1385, %v1384
    %vm1387 = vcmp.lt.s32.totalorder %v1362, 0
    %v1388 = vsub.s32 0, %v1362
    %v1389 = vsel %vm1387, %v1388, %v1362
    %v1390 = vshrl.u32 %v1389, 2
    %v1391 = vand.u32 %v1389, 3
    %v1392 = vsub.s32 0, %v1391
    %v1393 = vsel %vm1387, %v1392, %v1391
    %vm1394 = vcmp.lt.s32.totalorder %v1363, 0
    %v1395 = vsub.s32 0, %v1363
    %v1396 = vsel %vm1394, %v1395, %v1363
    %v1397 = vshrl.u32 %v1396, 2
    %v1398 = vand.u32 %v1396, 3
    %v1399 = vsub.s32 0, %v1398
    %v1400 = vsel %vm1394, %v1399, %v1398
    %vm1401 = vcmp.ne.s32.totalorder %v1372, 0
    %vm1402 = vcmp.ne.s32.totalorder %v1379, 0
    %vm1403 = vcmp.ne.s32.totalorder %v1386, 0
    %vm1404 = vcmp.ne.s32.totalorder %v1393, 0
    %vm1405 = vcmp.ne.s32.totalorder %v1400, 0
    %vm1406 = vcmp.lt.s32.totalorder %v1372, 0
    %vm1407 = vcmp.lt.s32.totalorder %v1379, 0
    %vm1408 = vcmp.lt.s32.totalorder %v1386, 0
    %vm1409 = vcmp.lt.s32.totalorder %v1393, 0
    %vm1410 = vcmp.lt.s32.totalorder %v1400, 0
    %vm1411 = vmand %vm1406, %vm1401
    %vm1412 = vmand %vm1407, %vm1402
    %vm1413 = vmand %vm1408, %vm1403
    %vm1414 = vmand %vm1409, %vm1404
    %vm1415 = vmand %vm1410, %vm1405
    %v1416 = vadd.s32 %v1372, 4
    %v1417 = vadd.s32 %v1379, 4
    %v1418 = vadd.s32 %v1386, 4
    %v1419 = vadd.s32 %v1393, 4
    %v1420 = vadd.s32 %v1400, 4
    %v1421 = vsel %vm1411, %v1416, %v1372
    %v1422 = vsel %vm1412, %v1417, %v1379
    %v1423 = vsel %vm1413, %v1418, %v1386
    %v1424 = vsel %vm1414, %v1419, %v1393
    %v1425 = vsel %vm1415, %v1420, %v1400
    %vm1426 = vcmp.eq.s32.totalorder %v1421, %v1365
    %vm1427 = vcmp.eq.s32.totalorder %v1422, %v1365
    %vm1428 = vcmp.eq.s32.totalorder %v1423, %v1365
    %vm1429 = vcmp.eq.s32.totalorder %v1424, %v1365
    %vm1430 = vcmp.eq.s32.totalorder %v1425, %v1365
    %v1431 = vsel %vm1426, 1, 0
    %v1432 = vsel %vm1427, 1, 0
    %v1433 = vsel %vm1428, 1, 0
    %v1434 = vsel %vm1429, 1, 0
    %v1435 = vsel %vm1430, 1, 0
    %v1436 = vcvt.s32.f32 %v1431
    %v1437 = vcvt.s32.f32 %v1432
    %v1438 = vcvt.s32.f32 %v1433
    %v1439 = vcvt.s32.f32 %v1434
    %v1440 = vcvt.s32.f32 %v1435
    %vm1441 = vcmp.lt.s32.totalorder %v1365, 0
    %v1442 = vsub.s32 0, %v1365
    %v1443 = vsel %vm1441, %v1442, %v1365
    %v1444 = vshrl.u32 %v1443, 2
    %v1445 = vand.u32 %v1443, 3
    %v1446 = vsub.s32 0, %v1445
    %v1447 = vsel %vm1441, %v1446, %v1445
    %vm1448 = vcmp.ne.s32.totalorder %v1447, 0
    %vm1449 = vcmp.lt.s32.totalorder %v1447, 0
    %vm1450 = vmand %vm1449, %vm1448
    %v1451 = vadd.s32 %v1447, 4
    %v1452 = vsel %vm1450, %v1451, %v1447
    %vm1453 = vcmp.eq.s32.totalorder %v1452, %v1359
    %v1454 = vsel %vm1453, 1, 0
    %v1455 = vcvt.s32.f32 %v1454
    %vm1456 = vcmask 326656
    %v1458 = vsel %vm1456, %v1350, 0
    %v1461 = vsel %vm1456, %v1355, 0
    %1463 = vmatprep.subr.mxu0 0.0
    %1464 = vmatpush1.msra.mxu0 %v1436
    %1465 = vmatprep.subr.mxu0 0.0
    %1466 = vmatpush1.msra.mxu0 %v1437
    %1467 = vmatprep.subr.mxu0 0.0
    %1468 = vmatpush1.msra.mxu0 %v1438
    %1469 = vmatprep.subr.mxu0 0.0
    %1470 = vmatpush1.msra.mxu0 %v1439
    %1471 = vmatprep.subr.mxu0 0.0
    %1472 = vmatpush1.msra.mxu0 %v1440
    %1473 = vmatprep.subr.mxu0 0.0
    %1474 = vmatpush1.msra.mxu0 0.0
    %1475 = vmatprep.subr.mxu0 0.0
    %1476 = vmatpush1.msra.mxu0 0.0
    %1477 = vmatprep.subr.mxu0 0.0
    %1478 = vmatpush1.msra.mxu0 0.0
    %1479 = vmatprep.subr.mxu0 0.0
    %1480 = vmatpush1.msra.mxu0 0.0
    %1481 = vmatprep.subr.mxu0 0.0
    %1482 = vmatpush1.msra.mxu0 0.0
    %1483 = vmatprep.subr.mxu0 0.0
    %1484 = vmatpush1.msra.mxu0 0.0
    %1485 = vmatprep.subr.mxu0 0.0
    %1486 = vmatpush1.msra.mxu0 0.0
    %1487 = vmatprep.subr.mxu0 0.0
    %1488 = vmatpush1.msra.mxu0 0.0
    %1489 = vmatprep.subr.mxu0 0.0
    %1490 = vmatpush1.msra.mxu0 0.0
    %1491 = vmatprep.subr.mxu0 0.0
    %1492 = vmatpush1.msra.mxu0 0.0
    %1493 = vmatprep.subr.mxu0 0.0
    %1494 = vmatpush1.msra.mxu0 0.0
    %1495 = vmatprep.subr.mxu0 0.0
    %1496 = vmatpush1.msra.mxu0 0.0
    %1497 = vmatprep.subr.mxu0 0.0
    %1498 = vmatpush1.msra.mxu0 0.0
    %1499 = vmatprep.subr.mxu0 0.0
    %1500 = vmatpush1.msra.mxu0 0.0
    %1501 = vmatprep.subr.mxu0 0.0
    %1502 = vmatpush1.msra.mxu0 0.0
    %1503 = vmatprep.subr.mxu0 0.0
    %1504 = vmatpush1.msra.mxu0 0.0
    %1505 = vmatprep.subr.mxu0 0.0
    %1506 = vmatpush1.msra.mxu0 0.0
    %1507 = vmatprep.subr.mxu0 0.0
    %1508 = vmatpush1.msra.mxu0 0.0
    %1509 = vmatprep.subr.mxu0 0.0
    %1510 = vmatpush1.msra.mxu0 0.0
    %1511 = vmatprep.subr.mxu0 0.0
    %1512 = vmatpush1.msra.mxu0 0.0
    %1513 = vmatprep.subr.mxu0 0.0
    %1514 = vmatpush1.msra.mxu0 0.0
    %1515 = vmatprep.subr.mxu0 0.0
    %1516 = vmatpush1.msra.mxu0 0.0
    %1517 = vmatprep.subr.mxu0 0.0
    %1518 = vmatpush1.msra.mxu0 0.0
    %1519 = vmatprep.subr.mxu0 0.0
    %1520 = vmatpush1.msra.mxu0 0.0
    %1521 = vmatprep.subr.mxu0 0.0
    %1522 = vmatpush1.msra.mxu0 0.0
    %1523 = vmatprep.subr.mxu0 0.0
    %1524 = vmatpush1.msra.mxu0 0.0
    %1525 = vmatprep.subr.mxu0 0.0
    %1526 = vmatpush1.msra.mxu0 0.0
    %1527 = vmatprep.mubr.f32.mxu0 0.0
    %1528 = vmatmul.mubr.f32.gmra.mrb[0].mxu0 %v1458
    %v1529 = vpop.f32.mrb[0].mxu0
    %v1530 = vadd.f32 0.0, %v1529
    %v1531 = vpop.f32.mrb[0].mxu0
    %1532 = vmatprep.mubr.f32.mxu0 0.0
    %1533 = vmatmul.mubr.f32.gmra.mrb[0].mxu0 %v1461
    %v1534 = vpop.f32.mrb[0].mxu0
    %v1535 = vadd.f32 0.0, %v1534
    %v1536 = vpop.f32.mrb[0].mxu0
    %1537 = vdwg.mxu0
    %v1538 = vmul.f32 %v1530, 0.1
    %v1539 = vmul.f32 %v1535, 0.1
    %vm1540 = vcmask 31744
    %v1542 = vsel %vm1540, %v1538, 0
    %v1545 = vsel %vm1540, %v1539, 0
    %vm1547 = vcmask 1043456
    %v1549 = vsel %vm1547, %v1455, 0
    %1551 = vmatprep.subr.mxu0 0.0
    %1552 = vmatpush1.msra.mxu0 %v1549
    %1553 = vmatprep.subr.mxu0 0.0
    %1554 = vmatpush1.msra.mxu0 0.0
    %1555 = vmatprep.subr.mxu0 0.0
    %1556 = vmatpush1.msra.mxu0 0.0
    %1557 = vmatprep.subr.mxu0 0.0
    %1558 = vmatpush1.msra.mxu0 0.0
    %1559 = vmatprep.subr.mxu0 0.0
    %1560 = vmatpush1.msra.mxu0 0.0
    %1561 = vmatprep.subr.mxu0 0.0
    %1562 = vmatpush1.msra.mxu0 0.0
    %1563 = vmatprep.subr.mxu0 0.0
    %1564 = vmatpush1.msra.mxu0 0.0
    %1565 = vmatprep.subr.mxu0 0.0
    %1566 = vmatpush1.msra.mxu0 0.0
    %1567 = vmatprep.subr.mxu0 0.0
    %1568 = vmatpush1.msra.mxu0 0.0
    %1569 = vmatprep.subr.mxu0 0.0
    %1570 = vmatpush1.msra.mxu0 0.0
    %1571 = vmatprep.subr.mxu0 0.0
    %1572 = vmatpush1.msra.mxu0 0.0
    %1573 = vmatprep.subr.mxu0 0.0
    %1574 = vmatpush1.msra.mxu0 0.0
    %1575 = vmatprep.subr.mxu0 0.0
    %1576 = vmatpush1.msra.mxu0 0.0
    %1577 = vmatprep.subr.mxu0 0.0
    %1578 = vmatpush1.msra.mxu0 0.0
    %1579 = vmatprep.subr.mxu0 0.0
    %1580 = vmatpush1.msra.mxu0 0.0
    %1581 = vmatprep.subr.mxu0 0.0
    %1582 = vmatpush1.msra.mxu0 0.0
    %1583 = vmatprep.subr.mxu0 0.0
    %1584 = vmatpush1.msra.mxu0 0.0
    %1585 = vmatprep.subr.mxu0 0.0
    %1586 = vmatpush1.msra.mxu0 0.0
    %1587 = vmatprep.subr.mxu0 0.0
    %1588 = vmatpush1.msra.mxu0 0.0
    %1589 = vmatprep.subr.mxu0 0.0
    %1590 = vmatpush1.msra.mxu0 0.0
    %1591 = vmatprep.subr.mxu0 0.0
    %1592 = vmatpush1.msra.mxu0 0.0
    %1593 = vmatprep.subr.mxu0 0.0
    %1594 = vmatpush1.msra.mxu0 0.0
    %1595 = vmatprep.subr.mxu0 0.0
    %1596 = vmatpush1.msra.mxu0 0.0
    %1597 = vmatprep.subr.mxu0 0.0
    %1598 = vmatpush1.msra.mxu0 0.0
    %1599 = vmatprep.subr.mxu0 0.0
    %1600 = vmatpush1.msra.mxu0 0.0
    %1601 = vmatprep.subr.mxu0 0.0
    %1602 = vmatpush1.msra.mxu0 0.0
    %1603 = vmatprep.subr.mxu0 0.0
    %1604 = vmatpush1.msra.mxu0 0.0
    %1605 = vmatprep.subr.mxu0 0.0
    %1606 = vmatpush1.msra.mxu0 0.0
    %1607 = vmatprep.subr.mxu0 0.0
    %1608 = vmatpush1.msra.mxu0 0.0
    %1609 = vmatprep.subr.mxu0 0.0
    %1610 = vmatpush1.msra.mxu0 0.0
    %1611 = vmatprep.subr.mxu0 0.0
    %1612 = vmatpush1.msra.mxu0 0.0
    %1613 = vmatprep.subr.mxu0 0.0
    %1614 = vmatpush1.msra.mxu0 0.0
    %1615 = vmatprep.mubr.f32.mxu0 0.0
    %1616 = vmatmul.mubr.f32.gmra.mrb[0].mxu0 %v1542
    %v1617 = vpop.f32.mrb[0].mxu0
    %v1618 = vadd.f32 0.0, %v1617
    %v1619 = vpop.f32.mrb[0].mxu0
    %1620 = vmatprep.mubr.f32.mxu0 0.0
    %1621 = vmatmul.mubr.f32.gmra.mrb[0].mxu0 %v1545
    %v1622 = vpop.f32.mrb[0].mxu0
    %v1623 = vadd.f32 0.0, %v1622
    %v1624 = vpop.f32.mrb[0].mxu0
    %1625 = vdwg.mxu0
    %v1626 = vsub.f32 %v1350, %v1618
    %v1627 = vsub.f32 %v1355, %v1623
    %v1628 = vmul.f32 %v1626, %v1626
    %v1629 = vmul.f32 %v1627, %v1627
    %v1631 = vsel %vm1456, %v1628, 0
    %v1634 = vsel %vm1456, %v1629, 0
    %1636 = vmatprep.subr.mxu0 0.0
    %1637 = vmatpush1.msra.mxu0 %v1436
    %1638 = vmatprep.subr.mxu0 0.0
    %1639 = vmatpush1.msra.mxu0 %v1437
    %1640 = vmatprep.subr.mxu0 0.0
    %1641 = vmatpush1.msra.mxu0 %v1438
    %1642 = vmatprep.subr.mxu0 0.0
    %1643 = vmatpush1.msra.mxu0 %v1439
    %1644 = vmatprep.subr.mxu0 0.0
    %1645 = vmatpush1.msra.mxu0 %v1440
    %1646 = vmatprep.subr.mxu0 0.0
    %1647 = vmatpush1.msra.mxu0 0.0
    %1648 = vmatprep.subr.mxu0 0.0
    %1649 = vmatpush1.msra.mxu0 0.0
    %1650 = vmatprep.subr.mxu0 0.0
    %1651 = vmatpush1.msra.mxu0 0.0
    %1652 = vmatprep.subr.mxu0 0.0
    %1653 = vmatpush1.msra.mxu0 0.0
    %1654 = vmatprep.subr.mxu0 0.0
    %1655 = vmatpush1.msra.mxu0 0.0
    %1656 = vmatprep.subr.mxu0 0.0
    %1657 = vmatpush1.msra.mxu0 0.0
    %1658 = vmatprep.subr.mxu0 0.0
    %1659 = vmatpush1.msra.mxu0 0.0
    %1660 = vmatprep.subr.mxu0 0.0
    %1661 = vmatpush1.msra.mxu0 0.0
    %1662 = vmatprep.subr.mxu0 0.0
    %1663 = vmatpush1.msra.mxu0 0.0
    %1664 = vmatprep.subr.mxu0 0.0
    %1665 = vmatpush1.msra.mxu0 0.0
    %1666 = vmatprep.subr.mxu0 0.0
    %1667 = vmatpush1.msra.mxu0 0.0
    %1668 = vmatprep.subr.mxu0 0.0
    %1669 = vmatpush1.msra.mxu0 0.0
    %1670 = vmatprep.subr.mxu0 0.0
    %1671 = vmatpush1.msra.mxu0 0.0
    %1672 = vmatprep.subr.mxu0 0.0
    %1673 = vmatpush1.msra.mxu0 0.0
    %1674 = vmatprep.subr.mxu0 0.0
    %1675 = vmatpush1.msra.mxu0 0.0
    %1676 = vmatprep.subr.mxu0 0.0
    %1677 = vmatpush1.msra.mxu0 0.0
    %1678 = vmatprep.subr.mxu0 0.0
    %1679 = vmatpush1.msra.mxu0 0.0
    %1680 = vmatprep.subr.mxu0 0.0
    %1681 = vmatpush1.msra.mxu0 0.0
    %1682 = vmatprep.subr.mxu0 0.0
    %1683 = vmatpush1.msra.mxu0 0.0
    %1684 = vmatprep.subr.mxu0 0.0
    %1685 = vmatpush1.msra.mxu0 0.0
    %1686 = vmatprep.subr.mxu0 0.0
    %1687 = vmatpush1.msra.mxu0 0.0
    %1688 = vmatprep.subr.mxu0 0.0
    %1689 = vmatpush1.msra.mxu0 0.0
    %1690 = vmatprep.subr.mxu0 0.0
    %1691 = vmatpush1.msra.mxu0 0.0
    %1692 = vmatprep.subr.mxu0 0.0
    %1693 = vmatpush1.msra.mxu0 0.0
    %1694 = vmatprep.subr.mxu0 0.0
    %1695 = vmatpush1.msra.mxu0 0.0
    %1696 = vmatprep.subr.mxu0 0.0
    %1697 = vmatpush1.msra.mxu0 0.0
    %1698 = vmatprep.subr.mxu0 0.0
    %1699 = vmatpush1.msra.mxu0 0.0
    %1700 = vmatprep.mubr.f32.mxu0 0.0
    %1701 = vmatmul.mubr.f32.gmra.mrb[0].mxu0 %v1631
    %v1702 = vpop.f32.mrb[0].mxu0
    %v1703 = vadd.f32 0.0, %v1702
    %v1704 = vpop.f32.mrb[0].mxu0
    %1705 = vmatprep.mubr.f32.mxu0 0.0
    %1706 = vmatmul.mubr.f32.gmra.mrb[0].mxu0 %v1634
    %v1707 = vpop.f32.mrb[0].mxu0
    %v1708 = vadd.f32 0.0, %v1707
    %v1709 = vpop.f32.mrb[0].mxu0
    %1710 = vdwg.mxu0
    %v1711 = vmul.f32 %v1703, 0.11111111
    %v1712 = vmul.f32 %v1708, 0.11111111
    %v1713 = vlog2.pop %v1711
    %v1714 = vmul.f32 %v1713, 0.6931472
    %v1715 = vlog2.pop %v1712
    %v1716 = vmul.f32 %v1715, 0.6931472
    %1719 = vrot.lane.b32.xlu0 %v1714, 4
    %v1720 = vpop.permute.xlu0 %1719
    %1721 = vrot.lane.b32.xlu0 %v1716, 4
    %v1722 = vpop.permute.xlu0 %1721
    %v1725 = vsel %vm1540, %v1538, %v1720
    %v1726 = vsel %vm1540, %v1539, %v1722
    %v1727 = vsel %vm83, %v1725, 0.0
    %v1728 = vsel %vm83, %v1726, 0.0
    %1729 = vst [vmem:[#allocation7] sm:$0xff] %v1727
    %1730 = vst [vmem:[#allocation7 + $0x8] sm:$0xff] %v1728
    // Predicated region
    $region46: #{tpu_custom_call.1} parent=1 // pred_check
      _
    $region47: #{tpu_custom_call.1} parent=1 // pred_check_branch
      %1732 = sbr.rel (0) target = $region49
    $region48: #{tpu_custom_call.1} parent=1 // pred_region
      %s1734 = ssub.s32 256, 256
      %1735 = vsyncadd [#allocation4], %s1734
      %s1736 = sshll.u32 [#allocation7], 4
      %s1737 = int_to_ptr.vmem [resolvable:$true] %s1736
      %1742 = dma.vmem_to_hbm [thread:$0]  %s1737, 256, %s9, [#allocation4], 128, 128, 8
    $region49: #{tpu_custom_call.1} parent=1 // pred_fallthru
      _
    // Predicated region
    $region50: #{tpu_custom_call.1} parent=1 // pred_check
      _
    $region51: #{tpu_custom_call.1} parent=1 // pred_check_branch
      %1744 = sbr.rel (0) target = $region53
    $region52: #{tpu_custom_call.1} parent=1 // pred_region
      %1745 = dma.done [#allocation4], 256
    $region53: #{tpu_custom_call.1} parent=1 // pred_fallthru
      _
    %1746 = vsyncpa [#allocation3], 1
    %1747 = vsyncpa [#allocation6], 1
    %1748 = vsyncpa [#allocation4], 1

</llo_original>
